<compile_context>
chip_gen: v5e
topology: v5e:2x2
jax: 0.10.0
libtpu: 0.0.40
codegen_flags: <defaults>
</compile_context>

<pallas_src>
import functools

import jax
import jax.numpy as jnp
from jax.experimental import pallas as pl
from jax.experimental.pallas import tpu as pltpu  # noqa: F401  (TPU backend)


OUT_W = 128  # lane-dense head output slab width: cls[0:2] | bbox[2:6] | pad


# ----------------------------------------------------------------------------
# In-kernel helpers
# ----------------------------------------------------------------------------
def _dotf(h_f32, w_ref, b_ref):
    """bf16 MXU matmul with f32 accumulation + f32 row bias."""
    return jnp.dot(h_f32.astype(jnp.bfloat16), w_ref[...],
                   preferred_element_type=jnp.float32) + b_ref[...]


def _mlp_chain(x_ref, layers, relu_flags):
    h = x_ref[...].astype(jnp.float32)
    for (w_ref, b_ref), do_relu in zip(layers, relu_flags):
        h = _dotf(h, w_ref, b_ref)
        if do_relu:
            h = jnp.maximum(h, 0.0)
    return h


# ----------------------------------------------------------------------------
# Pallas kernels
# ----------------------------------------------------------------------------
def _fused_mlp_kernel(*refs, num_layers, relu_flags):
    """Backbone-only kernel (template() path): patches -> MLP chain -> feat."""
    layers = [(refs[1 + 2 * i], refs[2 + 2 * i]) for i in range(num_layers)]
    o_ref = refs[1 + 2 * num_layers]
    o_ref[...] = _mlp_chain(refs[0], layers, relu_flags).astype(o_ref.dtype)


def _transt_fused_kernel(*refs, B, Lz, Lx, D,
                         n_z_layers, z_relu, n_x_layers, x_relu):
    """Whole forward in one kernel: backbones + cross-attn + FFN + head."""
    it = iter(refs)
    z_in = next(it)          # (B*Lz, Fz) patches  OR  (B*Lz, D) features
    x_in = next(it)          # (B*Lx, Fx) patches
    z_pos_ref = next(it)     # (Lz, D)
    x_pos_ref = next(it)     # (Lx, D)
    z_layers = [(next(it), next(it)) for _ in range(n_z_layers)]
    x_layers = [(next(it), next(it)) for _ in range(n_x_layers)]
    (wq, bq, wk, bk, wv, bv, wo, bo,
     wf1, bf1, wf2, bf2) = (next(it) for _ in range(12))
    wh1, bh1, wh2, bh2, wh3, bh3 = (next(it) for _ in range(6))
    out_ref = next(it)       # (B*Lx, OUT_W)

    # --- backbones + input projections (fused MLP chains) -------------------
    if n_z_layers > 0:
        z_feat = _mlp_chain(z_in, z_layers, z_relu)          # (B*Lz, D)
    else:                                                    # track(): feat given
        z_feat = z_in[...].astype(jnp.float32)
    x_feat = _mlp_chain(x_in, x_layers, x_relu)              # (B*Lx, D)

    # --- cross-attention fusion block (whole batch, one block) --------------
    z_pos = z_pos_ref[...].astype(jnp.float32)
    x_pos = x_pos_ref[...].astype(jnp.float32)
    q_in = (x_feat.reshape(B, Lx, D) + x_pos[None]).reshape(B * Lx, D)
    k_in = (z_feat.reshape(B, Lz, D) + z_pos[None]).reshape(B * Lz, D)

    q = _dotf(q_in, wq, bq).reshape(B, Lx, D)   # Wq/bq pre-scaled by 1/sqrt(D)
    k = _dotf(k_in, wk, bk).reshape(B, Lz, D)
    v = _dotf(z_feat, wv, bv).reshape(B, Lz, D)

    s = jnp.einsum('bqd,bkd->bqk', q.astype(jnp.bfloat16),
                   k.astype(jnp.bfloat16), preferred_element_type=jnp.float32)
    s = s - jnp.max(s, axis=-1, keepdims=True)
    p = jnp.exp(s)
    p = p * pl.reciprocal(jnp.sum(p, axis=-1, keepdims=True), approx=True)
    attn = jnp.einsum('bqk,bkd->bqd', p.astype(jnp.bfloat16),
                      v.astype(jnp.bfloat16),
                      preferred_element_type=jnp.float32).reshape(B * Lx, D)

    h = x_feat + _dotf(attn, wo, bo)                         # residual 1
    ff = jnp.maximum(_dotf(h, wf1, bf1), 0.0)
    feat = h + _dotf(ff, wf2, bf2)                           # (B*Lx, D)

    # --- head: cls linear fused into first bbox matmul (shared input) -------
    y = _dotf(feat, wh1, bh1)                                # (B*Lx, D + 2)
    hb = jnp.maximum(y[:, :D], 0.0)
    cls = y[:, D:D + 2]
    hb = jnp.maximum(_dotf(hb, wh2, bh2), 0.0)
    box_logits = _dotf(hb, wh3, bh3)                         # (B*Lx, 4)
    box = 1.0 / (1.0 + jnp.exp(-box_logits))                 # sigmoid, f32

    pad = jnp.zeros((B * Lx, OUT_W - 6), jnp.float32)
    out_ref[...] = jnp.concatenate([cls, box, pad],
                                   axis=-1).astype(out_ref.dtype)


# ----------------------------------------------------------------------------
# Parameter helpers
# ----------------------------------------------------------------------------
def xavier_uniform(key, fan_in, fan_out):
    limit = (6.0 / (fan_in + fan_out)) ** 0.5
    return jax.random.uniform(key, (fan_in, fan_out), jnp.float32, -limit, limit)


def linear_params(key, fan_in, fan_out):
    return {"w": xavier_uniform(key, fan_in, fan_out),
            "b": jnp.zeros((fan_out,), jnp.float32)}


def _wb(p, scale=1.0):
    """Prepare (bf16 weight, f32 row-bias) for in-kernel use."""
    w = (p["w"] * scale).astype(jnp.bfloat16)
    b = (p["b"] * scale).reshape(1, -1).astype(jnp.float32)
    return w, b


# ----------------------------------------------------------------------------
# Plain-JAX glue (patch extraction, sine position encoding — computed once)
# ----------------------------------------------------------------------------
def extract_patches(img, patch):
    """(B, H, W, C) -> (B, (H/p)*(W/p), p*p*C)   (non-overlapping patches)."""
    B, H, W, C = img.shape
    x = img.reshape(B, H // patch, patch, W // patch, patch, C)
    x = x.transpose(0, 1, 3, 2, 4, 5)
    return x.reshape(B, (H // patch) * (W // patch), patch * patch * C)


def patches_for_stage(img, stage):
    """Stage-1: 4x4 patches.  Stage-2: 8x8 super-patches laid out as a 2x2
    grid of 4x4 patches in one fused transpose (no intermediate re-patching);
    the fused block-diagonal stem consumes this ordering directly."""
    if stage == 1:
        return extract_patches(img, 4)
    B, H, W, C = img.shape
    x = img.reshape(B, H // 8, 2, 4, W // 8, 2, 4, C)
    x = x.transpose(0, 1, 4, 2, 5, 3, 6, 7)     # B, I, J, di, dj, pi, pj, C
    return x.reshape(B, (H // 8) * (W // 8), 2 * 2 * 4 * 4 * C)


def sine_position_encoding(h, w, d, temperature=10000.0):
    """DETR/TransT-style sine position embedding, returned as (h*w, d)."""
    num_pos_feats = d // 2
    y = jnp.arange(1, h + 1, dtype=jnp.float32)
    x = jnp.arange(1, w + 1, dtype=jnp.float32)
    y_embed = jnp.tile(y[:, None], (1, w)) / h * 2.0 * jnp.pi
    x_embed = jnp.tile(x[None, :], (h, 1)) / w * 2.0 * jnp.pi
    dim_t = temperature ** (2.0 * (jnp.arange(num_pos_feats) // 2) / num_pos_feats)
    pos_x = x_embed[..., None] / dim_t
    pos_y = y_embed[..., None] / dim_t
    pos_x = jnp.stack([jnp.sin(pos_x[..., 0::2]), jnp.cos(pos_x[..., 1::2])],
                      axis=-1).reshape(h, w, -1)
    pos_y = jnp.stack([jnp.sin(pos_y[..., 0::2]), jnp.cos(pos_y[..., 1::2])],
                      axis=-1).reshape(h, w, -1)
    return jnp.concatenate([pos_y, pos_x], axis=-1).reshape(h * w, d)


# ----------------------------------------------------------------------------
# TransTVariantBackboneDifferentOutputStageNetwork (JAX / Pallas version)
# ----------------------------------------------------------------------------
class TransTVariantBackboneDifferentOutputStageNetwork:
    def __init__(self, key, *, transformer_hidden_dim=32,
                 template_output_stage=1, template_output_dim=24,
                 template_output_shape=(4, 4),
                 search_output_stage=2, search_output_dim=48,
                 search_output_shape=(4, 4), ffn_dim=64):
        keys = jax.random.split(key, 16)
        c1, c2 = template_output_dim, search_output_dim
        d = transformer_hidden_dim
        self.hidden_dim = d
        self.ffn_dim = ffn_dim
        self.template_output_stage = template_output_stage
        self.search_output_stage = search_output_stage
        self.template_output_shape = tuple(template_output_shape)
        self.search_output_shape = tuple(search_output_shape)
        self.Lz = template_output_shape[0] * template_output_shape[1]
        self.Lx = search_output_shape[0] * search_output_shape[1]

        # backbone stem / stage-2 merge linear
        stem = linear_params(keys[0], 4 * 4 * 3, c1)
        stage2 = linear_params(keys[1], 4 * c1, c2)
        # input projections (xavier weights, as in the reference)
        proj_t = linear_params(keys[2], c1, d)
        proj_s = linear_params(keys[3], c2, d)

        # For the stage-2 branch the shared stem is block-diagonalized (4
        # copies) so the 2x2 token merge is part of one fused matmul chain.
        stem_bd = {"w": jnp.kron(jnp.eye(4, dtype=jnp.float32), stem["w"]),
                   "b": jnp.tile(stem["b"], 4)}

        def branch(stage, proj):
            if stage == 1:
                return [_wb(stem), _wb(proj)], (True, False)
            return [_wb(stem_bd), _wb(stage2), _wb(proj)], (True, True, False)

        self.template_layers, self.template_relu = branch(template_output_stage,
                                                          proj_t)
        self.search_layers, self.search_relu = branch(search_output_stage,
                                                      proj_s)

        # Transformer block (single cross-attention + FFN).
        # TODO(synk): full TransT feature fusion (multi-layer ECA/CFA +
        # LayerNorm) is simplified to one cross-attention block.
        scale = 1.0 / float(d) ** 0.5
        self.transformer = {
            "q": _wb(linear_params(keys[4], d, d), scale),   # scale folded in
            "k": _wb(linear_params(keys[5], d, d)),
            "v": _wb(linear_params(keys[6], d, d)),
            "o": _wb(linear_params(keys[7], d, d)),
            "ffn1": _wb(linear_params(keys[8], d, ffn_dim)),
            "ffn2": _wb(linear_params(keys[9], ffn_dim, d)),
        }

        # Head: classification linear + 3-layer bbox MLP.  The cls weight
        # (D->2) is concatenated into the first bbox matmul (shared input).
        cls_p = linear_params(keys[10], d, 2)
        box1_p = linear_params(keys[11], d, d)
        cls_box1 = {"w": jnp.concatenate([box1_p["w"], cls_p["w"]], axis=1),
                    "b": jnp.concatenate([box1_p["b"], cls_p["b"]])}
        self.head = {
            "cls_box1": _wb(cls_box1),                       # (D, D+2)
            "box2": _wb(linear_params(keys[12], d, d)),
            "box3": _wb(linear_params(keys[13], d, 4)),
        }

        # Position encodings depend only on static (h, w, d): compute once.
        self.z_pos = sine_position_encoding(*self.template_output_shape, d)
        self.x_pos = sine_position_encoding(*self.search_output_shape, d)

    # -- single fused kernel call (forward / track) ---------------------------
    def _run_fused(self, z_2d, x_2d, B, z_layers, z_relu, z_pos=None):
        d = self.hidden_dim
        z_pos = self.z_pos if z_pos is None else z_pos
        args = [z_2d.astype(jnp.float32), x_2d.astype(jnp.float32),
                z_pos, self.x_pos]
        for w, b in z_layers:
            args += [w, b]
        for w, b in self.search_layers:
            args += [w, b]
        tr = self.transformer
        args += [*tr["q"], *tr["k"], *tr["v"], *tr["o"],
                 *tr["ffn1"], *tr["ffn2"]]
        hd = self.head
        args += [*hd["cls_box1"], *hd["box2"], *hd["box3"]]

        kernel = functools.partial(
            _transt_fused_kernel, B=B, Lz=self.Lz, Lx=self.Lx, D=d,
            n_z_layers=len(z_layers), z_relu=tuple(z_relu),
            n_x_layers=len(self.search_layers), x_relu=tuple(self.search_relu))

        slab = pl.pallas_call(
            kernel,
            out_shape=jax.ShapeDtypeStruct((B * self.Lx, OUT_W), jnp.float32),
            cost_estimate=self._cost_estimate(args, B, z_layers),
        )(*args)
        cls = slab[:, :2].reshape(B, self.Lx, 2)
        box = slab[:, 2:6].reshape(B, self.Lx, 4)
        return {"class_score": cls, "bbox": box}

    def _cost_estimate(self, args, B, z_layers):
        d, f = self.hidden_dim, self.ffn_dim
        Mz, Mx = B * self.Lz, B * self.Lx
        flops = 0
        for w, _ in z_layers:
            flops += 2 * Mz * w.shape[0] * w.shape[1]
        for w, _ in self.search_layers:
            flops += 2 * Mx * w.shape[0] * w.shape[1]
        flops += 2 * Mx * d * d + 2 * 2 * Mz * d * d          # q / k,v proj
        flops += 2 * 2 * B * self.Lx * self.Lz * d            # scores + PV
        flops += 2 * Mx * d * d                                # out proj
        flops += 2 * 2 * Mx * d * f                            # FFN
        flops += 2 * Mx * d * (d + 2) + 2 * Mx * d * d + 2 * Mx * d * 4  # head
        transcendentals = B * self.Lx * self.Lz + 5 * Mx       # exp/recip/sigmoid
        bytes_accessed = sum(int(a.size) * a.dtype.itemsize for a in args)
        bytes_accessed += Mx * OUT_W * 4
        return pl.CostEstimate(flops=int(flops),
                               transcendentals=int(transcendentals),
                               bytes_accessed=int(bytes_accessed))

    # -- template backbone (one small fused MLP kernel) -----------------------
    def _forward_template_feat(self, z):
        patches = patches_for_stage(z, self.template_output_stage)
        B, L, F = patches.shape
        layers = self.template_layers
        args = [patches.reshape(B * L, F).astype(jnp.float32)]
        for w, b in layers:
            args += [w, b]
        kernel = functools.partial(_fused_mlp_kernel, num_layers=len(layers),
                                   relu_flags=tuple(self.template_relu))
        feat = pl.pallas_call(
            kernel,
            out_shape=jax.ShapeDtypeStruct((B * L, self.hidden_dim),
                                           jnp.float32),
        )(*args)
        feat = feat.reshape(B, L, self.hidden_dim)
        pos = jnp.broadcast_to(self.z_pos[None], (B, L, self.hidden_dim))
        return feat, pos

    # -- public API (mirrors the PyTorch module) ------------------------------
    def forward(self, z, x):
        zp = patches_for_stage(z, self.template_output_stage)
        xp = patches_for_stage(x, self.search_output_stage)
        B = zp.shape[0]
        return self._run_fused(zp.reshape(B * self.Lz, -1),
                               xp.reshape(B * self.Lx, -1), B,
                               self.template_layers, self.template_relu)

    def template(self, z):
        return self._forward_template_feat(z)

    def track(self, z_state, x):
        z_feat, z_pos = z_state
        B = z_feat.shape[0]
        xp = patches_for_stage(x, self.search_output_stage)
        # Position table is batch-invariant; the fused kernel takes it (Lz, D).
        return self._run_fused(z_feat.reshape(B * self.Lz, self.hidden_dim),
                               xp.reshape(B * self.Lx, -1), B,
                               [], (), z_pos=z_pos[0])


# ----------------------------------------------------------------------------
if __name__ == "__main__":
    key = jax.random.PRNGKey(0)
    k_net, k_z, k_x = jax.random.split(key, 3)

    net = TransTVariantBackboneDifferentOutputStageNetwork(k_net)

    B = 2
    # template crop 16x16 (stage-1 -> 4x4 tokens), search 32x32 (stage-2 -> 4x4)
    z = jax.random.normal(k_z, (B, 16, 16, 3), jnp.float32)   # NHWC
    x = jax.random.normal(k_x, (B, 32, 32, 3), jnp.float32)   # NHWC

    fwd = jax.jit(net.forward)
    out = jax.block_until_ready(fwd(z, x))

    assert out["class_score"].shape == (B, 16, 2)
    assert out["bbox"].shape == (B, 16, 4)
    assert bool(jnp.all(jnp.isfinite(out["class_score"])))
    assert bool(jnp.all(jnp.isfinite(out["bbox"])))

    # exercise the template/track path as well (reuses the same fused kernel)
    z_state = jax.block_until_ready(net.template(z))
    out2 = jax.block_until_ready(net.track(z_state, x))
    assert out2["class_score"].shape == (B, 16, 2)
    assert out2["bbox"].shape == (B, 16, 4)
    assert bool(jnp.all(jnp.isfinite(out2["class_score"])))
    assert bool(jnp.all(jnp.isfinite(out2["bbox"])))

    print("KERNEL_OK")
</pallas_src>

<mosaic_0001>
module attributes {stable_mosaic.version = 11 : i64} {
  func.func @_transt_fused_kernel(%arg0: memref<32x48xf32, #tpu.memory_space<vmem>>, %arg1: memref<32x192xf32, #tpu.memory_space<vmem>>, %arg2: memref<16x32xf32, #tpu.memory_space<vmem>>, %arg3: memref<16x32xf32, #tpu.memory_space<vmem>>, %arg4: memref<48x24xbf16, #tpu.memory_space<vmem>>, %arg5: memref<1x24xf32, #tpu.memory_space<vmem>>, %arg6: memref<24x32xbf16, #tpu.memory_space<vmem>>, %arg7: memref<1x32xf32, #tpu.memory_space<vmem>>, %arg8: memref<192x96xbf16, #tpu.memory_space<vmem>>, %arg9: memref<1x96xf32, #tpu.memory_space<vmem>>, %arg10: memref<96x48xbf16, #tpu.memory_space<vmem>>, %arg11: memref<1x48xf32, #tpu.memory_space<vmem>>, %arg12: memref<48x32xbf16, #tpu.memory_space<vmem>>, %arg13: memref<1x32xf32, #tpu.memory_space<vmem>>, %arg14: memref<32x32xbf16, #tpu.memory_space<vmem>>, %arg15: memref<1x32xf32, #tpu.memory_space<vmem>>, %arg16: memref<32x32xbf16, #tpu.memory_space<vmem>>, %arg17: memref<1x32xf32, #tpu.memory_space<vmem>>, %arg18: memref<32x32xbf16, #tpu.memory_space<vmem>>, %arg19: memref<1x32xf32, #tpu.memory_space<vmem>>, %arg20: memref<32x32xbf16, #tpu.memory_space<vmem>>, %arg21: memref<1x32xf32, #tpu.memory_space<vmem>>, %arg22: memref<32x64xbf16, #tpu.memory_space<vmem>>, %arg23: memref<1x64xf32, #tpu.memory_space<vmem>>, %arg24: memref<64x32xbf16, #tpu.memory_space<vmem>>, %arg25: memref<1x32xf32, #tpu.memory_space<vmem>>, %arg26: memref<32x34xbf16, #tpu.memory_space<vmem>>, %arg27: memref<1x34xf32, #tpu.memory_space<vmem>>, %arg28: memref<32x32xbf16, #tpu.memory_space<vmem>>, %arg29: memref<1x32xf32, #tpu.memory_space<vmem>>, %arg30: memref<32x4xbf16, #tpu.memory_space<vmem>>, %arg31: memref<1x4xf32, #tpu.memory_space<vmem>>, %arg32: memref<32x128xf32, #tpu.memory_space<vmem>>) attributes {dimension_semantics = [], scalar_prefetch = 0 : i64, scratch_operands = 0 : i64, tpu.core_type = #tpu.core_type<tc>} {
    %c0 = arith.constant 0 : index
    %c0_0 = arith.constant 0 : index
    %0 = vector.load %arg0[%c0, %c0_0] : memref<32x48xf32, #tpu.memory_space<vmem>>, vector<32x48xf32>
    %1 = arith.truncf %0 : vector<32x48xf32> to vector<32x48xbf16>
    %c0_1 = arith.constant 0 : index
    %c0_2 = arith.constant 0 : index
    %2 = vector.load %arg4[%c0_1, %c0_2] : memref<48x24xbf16, #tpu.memory_space<vmem>>, vector<48x24xbf16>
    %cst = arith.constant dense<0.000000e+00> : vector<32x24xf32>
    %3 = tpu.matmul %1, %2, %cst {dimension_numbers = #tpu.dot_dimension_numbers<[1], [0], [0], [1], [0, 0, 1, 1], [], []>} : vector<32x48xbf16>, vector<48x24xbf16>, vector<32x24xf32> -> vector<32x24xf32>
    %c0_3 = arith.constant 0 : index
    %c0_4 = arith.constant 0 : index
    %4 = vector.load %arg5[%c0_3, %c0_4] : memref<1x24xf32, #tpu.memory_space<vmem>>, vector<1x24xf32>
    %5 = vector.broadcast %4 : vector<1x24xf32> to vector<32x24xf32>
    %6 = arith.addf %3, %5 : vector<32x24xf32>
    %cst_5 = arith.constant 0.000000e+00 : f32
    %7 = vector.broadcast %cst_5 : f32 to vector<32x24xf32>
    %8 = arith.maximumf %6, %7 : vector<32x24xf32>
    %9 = arith.truncf %8 : vector<32x24xf32> to vector<32x24xbf16>
    %c0_6 = arith.constant 0 : index
    %c0_7 = arith.constant 0 : index
    %10 = vector.load %arg6[%c0_6, %c0_7] : memref<24x32xbf16, #tpu.memory_space<vmem>>, vector<24x32xbf16>
    %cst_8 = arith.constant dense<0.000000e+00> : vector<32x32xf32>
    %11 = tpu.matmul %9, %10, %cst_8 {dimension_numbers = #tpu.dot_dimension_numbers<[1], [0], [0], [1], [0, 0, 1, 1], [], []>} : vector<32x24xbf16>, vector<24x32xbf16>, vector<32x32xf32> -> vector<32x32xf32>
    %c0_9 = arith.constant 0 : index
    %c0_10 = arith.constant 0 : index
    %12 = vector.load %arg7[%c0_9, %c0_10] : memref<1x32xf32, #tpu.memory_space<vmem>>, vector<1x32xf32>
    %13 = vector.broadcast %12 : vector<1x32xf32> to vector<32x32xf32>
    %14 = arith.addf %11, %13 : vector<32x32xf32>
    %c0_11 = arith.constant 0 : index
    %c0_12 = arith.constant 0 : index
    %15 = vector.load %arg1[%c0_11, %c0_12] : memref<32x192xf32, #tpu.memory_space<vmem>>, vector<32x192xf32>
    %16 = arith.truncf %15 : vector<32x192xf32> to vector<32x192xbf16>
    %c0_13 = arith.constant 0 : index
    %c0_14 = arith.constant 0 : index
    %17 = vector.load %arg8[%c0_13, %c0_14] : memref<192x96xbf16, #tpu.memory_space<vmem>>, vector<192x96xbf16>
    %cst_15 = arith.constant dense<0.000000e+00> : vector<32x96xf32>
    %18 = tpu.matmul %16, %17, %cst_15 {dimension_numbers = #tpu.dot_dimension_numbers<[1], [0], [0], [1], [0, 0, 1, 1], [], []>} : vector<32x192xbf16>, vector<192x96xbf16>, vector<32x96xf32> -> vector<32x96xf32>
    %c0_16 = arith.constant 0 : index
    %c0_17 = arith.constant 0 : index
    %19 = vector.load %arg9[%c0_16, %c0_17] : memref<1x96xf32, #tpu.memory_space<vmem>>, vector<1x96xf32>
    %20 = vector.broadcast %19 : vector<1x96xf32> to vector<32x96xf32>
    %21 = arith.addf %18, %20 : vector<32x96xf32>
    %cst_18 = arith.constant 0.000000e+00 : f32
    %22 = vector.broadcast %cst_18 : f32 to vector<32x96xf32>
    %23 = arith.maximumf %21, %22 : vector<32x96xf32>
    %24 = arith.truncf %23 : vector<32x96xf32> to vector<32x96xbf16>
    %c0_19 = arith.constant 0 : index
    %c0_20 = arith.constant 0 : index
    %25 = vector.load %arg10[%c0_19, %c0_20] : memref<96x48xbf16, #tpu.memory_space<vmem>>, vector<96x48xbf16>
    %cst_21 = arith.constant dense<0.000000e+00> : vector<32x48xf32>
    %26 = tpu.matmul %24, %25, %cst_21 {dimension_numbers = #tpu.dot_dimension_numbers<[1], [0], [0], [1], [0, 0, 1, 1], [], []>} : vector<32x96xbf16>, vector<96x48xbf16>, vector<32x48xf32> -> vector<32x48xf32>
    %c0_22 = arith.constant 0 : index
    %c0_23 = arith.constant 0 : index
    %27 = vector.load %arg11[%c0_22, %c0_23] : memref<1x48xf32, #tpu.memory_space<vmem>>, vector<1x48xf32>
    %28 = vector.broadcast %27 : vector<1x48xf32> to vector<32x48xf32>
    %29 = arith.addf %26, %28 : vector<32x48xf32>
    %cst_24 = arith.constant 0.000000e+00 : f32
    %30 = vector.broadcast %cst_24 : f32 to vector<32x48xf32>
    %31 = arith.maximumf %29, %30 : vector<32x48xf32>
    %32 = arith.truncf %31 : vector<32x48xf32> to vector<32x48xbf16>
    %c0_25 = arith.constant 0 : index
    %c0_26 = arith.constant 0 : index
    %33 = vector.load %arg12[%c0_25, %c0_26] : memref<48x32xbf16, #tpu.memory_space<vmem>>, vector<48x32xbf16>
    %cst_27 = arith.constant dense<0.000000e+00> : vector<32x32xf32>
    %34 = tpu.matmul %32, %33, %cst_27 {dimension_numbers = #tpu.dot_dimension_numbers<[1], [0], [0], [1], [0, 0, 1, 1], [], []>} : vector<32x48xbf16>, vector<48x32xbf16>, vector<32x32xf32> -> vector<32x32xf32>
    %c0_28 = arith.constant 0 : index
    %c0_29 = arith.constant 0 : index
    %35 = vector.load %arg13[%c0_28, %c0_29] : memref<1x32xf32, #tpu.memory_space<vmem>>, vector<1x32xf32>
    %36 = vector.broadcast %35 : vector<1x32xf32> to vector<32x32xf32>
    %37 = arith.addf %34, %36 : vector<32x32xf32>
    %c0_30 = arith.constant 0 : index
    %c0_31 = arith.constant 0 : index
    %38 = vector.load %arg2[%c0_30, %c0_31] : memref<16x32xf32, #tpu.memory_space<vmem>>, vector<16x32xf32>
    %c0_32 = arith.constant 0 : index
    %c0_33 = arith.constant 0 : index
    %39 = vector.load %arg3[%c0_32, %c0_33] : memref<16x32xf32, #tpu.memory_space<vmem>>, vector<16x32xf32>
    %40 = vector.shape_cast %37 : vector<32x32xf32> to vector<2x16x32xf32>
    %41 = vector.shape_cast %39 : vector<16x32xf32> to vector<1x16x32xf32>
    %42 = vector.broadcast %41 : vector<1x16x32xf32> to vector<2x16x32xf32>
    %43 = arith.addf %40, %42 : vector<2x16x32xf32>
    %44 = vector.shape_cast %43 : vector<2x16x32xf32> to vector<32x32xf32>
    %45 = vector.shape_cast %14 : vector<32x32xf32> to vector<2x16x32xf32>
    %46 = vector.shape_cast %38 : vector<16x32xf32> to vector<1x16x32xf32>
    %47 = vector.broadcast %46 : vector<1x16x32xf32> to vector<2x16x32xf32>
    %48 = arith.addf %45, %47 : vector<2x16x32xf32>
    %49 = vector.shape_cast %48 : vector<2x16x32xf32> to vector<32x32xf32>
    %50 = arith.truncf %44 : vector<32x32xf32> to vector<32x32xbf16>
    %c0_34 = arith.constant 0 : index
    %c0_35 = arith.constant 0 : index
    %51 = vector.load %arg14[%c0_34, %c0_35] : memref<32x32xbf16, #tpu.memory_space<vmem>>, vector<32x32xbf16>
    %cst_36 = arith.constant dense<0.000000e+00> : vector<32x32xf32>
    %52 = tpu.matmul %50, %51, %cst_36 {dimension_numbers = #tpu.dot_dimension_numbers<[1], [0], [0], [1], [0, 0, 1, 1], [], []>} : vector<32x32xbf16>, vector<32x32xbf16>, vector<32x32xf32> -> vector<32x32xf32>
    %c0_37 = arith.constant 0 : index
    %c0_38 = arith.constant 0 : index
    %53 = vector.load %arg15[%c0_37, %c0_38] : memref<1x32xf32, #tpu.memory_space<vmem>>, vector<1x32xf32>
    %54 = vector.broadcast %53 : vector<1x32xf32> to vector<32x32xf32>
    %55 = arith.addf %52, %54 : vector<32x32xf32>
    %56 = vector.shape_cast %55 : vector<32x32xf32> to vector<2x16x32xf32>
    %57 = arith.truncf %49 : vector<32x32xf32> to vector<32x32xbf16>
    %c0_39 = arith.constant 0 : index
    %c0_40 = arith.constant 0 : index
    %58 = vector.load %arg16[%c0_39, %c0_40] : memref<32x32xbf16, #tpu.memory_space<vmem>>, vector<32x32xbf16>
    %cst_41 = arith.constant dense<0.000000e+00> : vector<32x32xf32>
    %59 = tpu.matmul %57, %58, %cst_41 {dimension_numbers = #tpu.dot_dimension_numbers<[1], [0], [0], [1], [0, 0, 1, 1], [], []>} : vector<32x32xbf16>, vector<32x32xbf16>, vector<32x32xf32> -> vector<32x32xf32>
    %c0_42 = arith.constant 0 : index
    %c0_43 = arith.constant 0 : index
    %60 = vector.load %arg17[%c0_42, %c0_43] : memref<1x32xf32, #tpu.memory_space<vmem>>, vector<1x32xf32>
    %61 = vector.broadcast %60 : vector<1x32xf32> to vector<32x32xf32>
    %62 = arith.addf %59, %61 : vector<32x32xf32>
    %63 = vector.shape_cast %62 : vector<32x32xf32> to vector<2x16x32xf32>
    %64 = arith.truncf %14 : vector<32x32xf32> to vector<32x32xbf16>
    %c0_44 = arith.constant 0 : index
    %c0_45 = arith.constant 0 : index
    %65 = vector.load %arg18[%c0_44, %c0_45] : memref<32x32xbf16, #tpu.memory_space<vmem>>, vector<32x32xbf16>
    %cst_46 = arith.constant dense<0.000000e+00> : vector<32x32xf32>
    %66 = tpu.matmul %64, %65, %cst_46 {dimension_numbers = #tpu.dot_dimension_numbers<[1], [0], [0], [1], [0, 0, 1, 1], [], []>} : vector<32x32xbf16>, vector<32x32xbf16>, vector<32x32xf32> -> vector<32x32xf32>
    %c0_47 = arith.constant 0 : index
    %c0_48 = arith.constant 0 : index
    %67 = vector.load %arg19[%c0_47, %c0_48] : memref<1x32xf32, #tpu.memory_space<vmem>>, vector<1x32xf32>
    %68 = vector.broadcast %67 : vector<1x32xf32> to vector<32x32xf32>
    %69 = arith.addf %66, %68 : vector<32x32xf32>
    %70 = vector.shape_cast %69 : vector<32x32xf32> to vector<2x16x32xf32>
    %71 = arith.truncf %56 : vector<2x16x32xf32> to vector<2x16x32xbf16>
    %72 = arith.truncf %63 : vector<2x16x32xf32> to vector<2x16x32xbf16>
    "tpu.trace_start"() <{level = 10 : i32, message = "bqd,bkd->bqk"}> : () -> ()
    %cst_49 = arith.constant dense<0.000000e+00> : vector<2x16x16xf32>
    %73 = tpu.matmul %71, %72, %cst_49 {dimension_numbers = #tpu.dot_dimension_numbers<[2], [2], [1], [1], [0, 0, 0, 1, 1, 1], [0], [0]>} : vector<2x16x32xbf16>, vector<2x16x32xbf16>, vector<2x16x16xf32> -> vector<2x16x16xf32>
    "tpu.trace_stop"() : () -> ()
    %cst_50 = arith.constant dense<0xFF800000> : vector<2x16xf32>
    %74 = vector.multi_reduction <maximumf>, %73, %cst_50 [2] : vector<2x16x16xf32> to vector<2x16xf32>
    %75 = vector.shape_cast %74 : vector<2x16xf32> to vector<2x16x1xf32>
    %76 = vector.broadcast %75 : vector<2x16x1xf32> to vector<2x16x16xf32>
    %77 = arith.subf %73, %76 : vector<2x16x16xf32>
    %78 = math.exp %77 : vector<2x16x16xf32>
    %cst_51 = arith.constant dense<0.000000e+00> : vector<2x16xf32>
    %79 = vector.multi_reduction <add>, %78, %cst_51 [2] : vector<2x16x16xf32> to vector<2x16xf32>
    %80 = vector.shape_cast %79 : vector<2x16xf32> to vector<2x16x1xf32>
    %81 = tpu.reciprocal %80 {approx = true} : vector<2x16x1xf32> -> vector<2x16x1xf32>
    %82 = vector.broadcast %81 : vector<2x16x1xf32> to vector<2x16x16xf32>
    %83 = arith.mulf %78, %82 : vector<2x16x16xf32>
    %84 = arith.truncf %83 : vector<2x16x16xf32> to vector<2x16x16xbf16>
    %85 = arith.truncf %70 : vector<2x16x32xf32> to vector<2x16x32xbf16>
    "tpu.trace_start"() <{level = 10 : i32, message = "bqk,bkd->bqd"}> : () -> ()
    %cst_52 = arith.constant dense<0.000000e+00> : vector<2x16x32xf32>
    %86 = tpu.matmul %84, %85, %cst_52 {dimension_numbers = #tpu.dot_dimension_numbers<[2], [1], [1], [2], [0, 0, 0, 1, 1, 2], [0], [0]>} : vector<2x16x16xbf16>, vector<2x16x32xbf16>, vector<2x16x32xf32> -> vector<2x16x32xf32>
    "tpu.trace_stop"() : () -> ()
    %87 = vector.shape_cast %86 : vector<2x16x32xf32> to vector<32x32xf32>
    %88 = arith.truncf %87 : vector<32x32xf32> to vector<32x32xbf16>
    %c0_53 = arith.constant 0 : index
    %c0_54 = arith.constant 0 : index
    %89 = vector.load %arg20[%c0_53, %c0_54] : memref<32x32xbf16, #tpu.memory_space<vmem>>, vector<32x32xbf16>
    %cst_55 = arith.constant dense<0.000000e+00> : vector<32x32xf32>
    %90 = tpu.matmul %88, %89, %cst_55 {dimension_numbers = #tpu.dot_dimension_numbers<[1], [0], [0], [1], [0, 0, 1, 1], [], []>} : vector<32x32xbf16>, vector<32x32xbf16>, vector<32x32xf32> -> vector<32x32xf32>
    %c0_56 = arith.constant 0 : index
    %c0_57 = arith.constant 0 : index
    %91 = vector.load %arg21[%c0_56, %c0_57] : memref<1x32xf32, #tpu.memory_space<vmem>>, vector<1x32xf32>
    %92 = vector.broadcast %91 : vector<1x32xf32> to vector<32x32xf32>
    %93 = arith.addf %90, %92 : vector<32x32xf32>
    %94 = arith.addf %37, %93 : vector<32x32xf32>
    %95 = arith.truncf %94 : vector<32x32xf32> to vector<32x32xbf16>
    %c0_58 = arith.constant 0 : index
    %c0_59 = arith.constant 0 : index
    %96 = vector.load %arg22[%c0_58, %c0_59] : memref<32x64xbf16, #tpu.memory_space<vmem>>, vector<32x64xbf16>
    %cst_60 = arith.constant dense<0.000000e+00> : vector<32x64xf32>
    %97 = tpu.matmul %95, %96, %cst_60 {dimension_numbers = #tpu.dot_dimension_numbers<[1], [0], [0], [1], [0, 0, 1, 1], [], []>} : vector<32x32xbf16>, vector<32x64xbf16>, vector<32x64xf32> -> vector<32x64xf32>
    %c0_61 = arith.constant 0 : index
    %c0_62 = arith.constant 0 : index
    %98 = vector.load %arg23[%c0_61, %c0_62] : memref<1x64xf32, #tpu.memory_space<vmem>>, vector<1x64xf32>
    %99 = vector.broadcast %98 : vector<1x64xf32> to vector<32x64xf32>
    %100 = arith.addf %97, %99 : vector<32x64xf32>
    %cst_63 = arith.constant 0.000000e+00 : f32
    %101 = vector.broadcast %cst_63 : f32 to vector<32x64xf32>
    %102 = arith.maximumf %100, %101 : vector<32x64xf32>
    %103 = arith.truncf %102 : vector<32x64xf32> to vector<32x64xbf16>
    %c0_64 = arith.constant 0 : index
    %c0_65 = arith.constant 0 : index
    %104 = vector.load %arg24[%c0_64, %c0_65] : memref<64x32xbf16, #tpu.memory_space<vmem>>, vector<64x32xbf16>
    %cst_66 = arith.constant dense<0.000000e+00> : vector<32x32xf32>
    %105 = tpu.matmul %103, %104, %cst_66 {dimension_numbers = #tpu.dot_dimension_numbers<[1], [0], [0], [1], [0, 0, 1, 1], [], []>} : vector<32x64xbf16>, vector<64x32xbf16>, vector<32x32xf32> -> vector<32x32xf32>
    %c0_67 = arith.constant 0 : index
    %c0_68 = arith.constant 0 : index
    %106 = vector.load %arg25[%c0_67, %c0_68] : memref<1x32xf32, #tpu.memory_space<vmem>>, vector<1x32xf32>
    %107 = vector.broadcast %106 : vector<1x32xf32> to vector<32x32xf32>
    %108 = arith.addf %105, %107 : vector<32x32xf32>
    %109 = arith.addf %94, %108 : vector<32x32xf32>
    %110 = arith.truncf %109 : vector<32x32xf32> to vector<32x32xbf16>
    %c0_69 = arith.constant 0 : index
    %c0_70 = arith.constant 0 : index
    %111 = vector.load %arg26[%c0_69, %c0_70] : memref<32x34xbf16, #tpu.memory_space<vmem>>, vector<32x34xbf16>
    %cst_71 = arith.constant dense<0.000000e+00> : vector<32x34xf32>
    %112 = tpu.matmul %110, %111, %cst_71 {dimension_numbers = #tpu.dot_dimension_numbers<[1], [0], [0], [1], [0, 0, 1, 1], [], []>} : vector<32x32xbf16>, vector<32x34xbf16>, vector<32x34xf32> -> vector<32x34xf32>
    %c0_72 = arith.constant 0 : index
    %c0_73 = arith.constant 0 : index
    %113 = vector.load %arg27[%c0_72, %c0_73] : memref<1x34xf32, #tpu.memory_space<vmem>>, vector<1x34xf32>
    %114 = vector.broadcast %113 : vector<1x34xf32> to vector<32x34xf32>
    %115 = arith.addf %112, %114 : vector<32x34xf32>
    %116 = vector.extract_strided_slice %115 {offsets = [0, 0], sizes = [32, 32], strides = [1, 1]} : vector<32x34xf32> to vector<32x32xf32>
    %cst_74 = arith.constant 0.000000e+00 : f32
    %117 = vector.broadcast %cst_74 : f32 to vector<32x32xf32>
    %118 = arith.maximumf %116, %117 : vector<32x32xf32>
    %119 = vector.extract_strided_slice %115 {offsets = [0, 32], sizes = [32, 2], strides = [1, 1]} : vector<32x34xf32> to vector<32x2xf32>
    %120 = arith.truncf %118 : vector<32x32xf32> to vector<32x32xbf16>
    %c0_75 = arith.constant 0 : index
    %c0_76 = arith.constant 0 : index
    %121 = vector.load %arg28[%c0_75, %c0_76] : memref<32x32xbf16, #tpu.memory_space<vmem>>, vector<32x32xbf16>
    %cst_77 = arith.constant dense<0.000000e+00> : vector<32x32xf32>
    %122 = tpu.matmul %120, %121, %cst_77 {dimension_numbers = #tpu.dot_dimension_numbers<[1], [0], [0], [1], [0, 0, 1, 1], [], []>} : vector<32x32xbf16>, vector<32x32xbf16>, vector<32x32xf32> -> vector<32x32xf32>
    %c0_78 = arith.constant 0 : index
    %c0_79 = arith.constant 0 : index
    %123 = vector.load %arg29[%c0_78, %c0_79] : memref<1x32xf32, #tpu.memory_space<vmem>>, vector<1x32xf32>
    %124 = vector.broadcast %123 : vector<1x32xf32> to vector<32x32xf32>
    %125 = arith.addf %122, %124 : vector<32x32xf32>
    %cst_80 = arith.constant 0.000000e+00 : f32
    %126 = vector.broadcast %cst_80 : f32 to vector<32x32xf32>
    %127 = arith.maximumf %125, %126 : vector<32x32xf32>
    %128 = arith.truncf %127 : vector<32x32xf32> to vector<32x32xbf16>
    %c0_81 = arith.constant 0 : index
    %c0_82 = arith.constant 0 : index
    %129 = vector.load %arg30[%c0_81, %c0_82] : memref<32x4xbf16, #tpu.memory_space<vmem>>, vector<32x4xbf16>
    %cst_83 = arith.constant dense<0.000000e+00> : vector<32x4xf32>
    %130 = tpu.matmul %128, %129, %cst_83 {dimension_numbers = #tpu.dot_dimension_numbers<[1], [0], [0], [1], [0, 0, 1, 1], [], []>} : vector<32x32xbf16>, vector<32x4xbf16>, vector<32x4xf32> -> vector<32x4xf32>
    %c0_84 = arith.constant 0 : index
    %c0_85 = arith.constant 0 : index
    %131 = vector.load %arg31[%c0_84, %c0_85] : memref<1x4xf32, #tpu.memory_space<vmem>>, vector<1x4xf32>
    %132 = vector.broadcast %131 : vector<1x4xf32> to vector<32x4xf32>
    %133 = arith.addf %130, %132 : vector<32x4xf32>
    %cst_86 = arith.constant 0.000000e+00 : f32
    %134 = vector.broadcast %cst_86 : f32 to vector<32x4xf32>
    %135 = arith.subf %134, %133 : vector<32x4xf32>
    %136 = math.exp %135 : vector<32x4xf32>
    %cst_87 = arith.constant 1.000000e+00 : f32
    %137 = vector.broadcast %cst_87 : f32 to vector<32x4xf32>
    %138 = arith.addf %137, %136 : vector<32x4xf32>
    %cst_88 = arith.constant 1.000000e+00 : f32
    %139 = vector.broadcast %cst_88 : f32 to vector<32x4xf32>
    %140 = arith.divf %139, %138 : vector<32x4xf32>
    %cst_89 = arith.constant 0.000000e+00 : f32
    %141 = vector.broadcast %cst_89 : f32 to vector<32x122xf32>
    %142 = tpu.concatenate %119, %140, %141 in 1 : vector<32x2xf32>, vector<32x4xf32>, vector<32x122xf32> -> vector<32x128xf32>
    %c0_90 = arith.constant 0 : index
    %c0_91 = arith.constant 0 : index
    %143 = vector.load %arg32[%c0_90, %c0_91] : memref<32x128xf32, #tpu.memory_space<vmem>>, vector<32x128xf32>
    tpu.vector_store %arg32[%c0_90, %c0_91], %142 {strides = array<i32>} : memref<32x128xf32, #tpu.memory_space<vmem>>, vector<32x128xf32>,
    return
  }
}

</mosaic_0001>

<llo_original>
// kernel: forward.1
$region0: #{forward.1}
  #allocation0 [shape = 'u32[]', space=smem, size = 0x4, offset = 0x4, fixed_abs, tag = 'smem constant byte address 0x4 - core index']
  #allocation1 [shape = 'u32[72,128]{1,0:T(1,128)}', space=vmem, size = 0x9000, scoped, tag = 'internal scratch']
  %s0 = inlined_call_operand.smem [shape: u32[33], index: -1, kind: input, shape index: {}]
  %s1 = sld [smem:[%s0]]
  %s2 = scalar_lea.smem %s0, 1
  %s3 = sld [smem:[%s2]]
  %s4 = scalar_lea.smem %s0, 2
  %s5 = sld [smem:[%s4]]
  %s6 = scalar_lea.smem %s0, 3
  %s7 = sld [smem:[%s6]]
  %s8 = scalar_lea.smem %s0, 4
  %s9 = sld [smem:[%s8]]
  %s10 = scalar_lea.smem %s0, 5
  %s11 = sld [smem:[%s10]]
  %s12 = scalar_lea.smem %s0, 6
  %s13 = sld [smem:[%s12]]
  %s14 = scalar_lea.smem %s0, 7
  %s15 = sld [smem:[%s14]]
  %s16 = scalar_lea.smem %s0, 8
  %s17 = sld [smem:[%s16]]
  %s18 = scalar_lea.smem %s0, 9
  %s19 = sld [smem:[%s18]]
  %s20 = scalar_lea.smem %s0, 10
  %s21 = sld [smem:[%s20]]
  %s22 = scalar_lea.smem %s0, 11
  %s23 = sld [smem:[%s22]]
  %s24 = scalar_lea.smem %s0, 12
  %s25 = sld [smem:[%s24]]
  %s26 = scalar_lea.smem %s0, 13
  %s27 = sld [smem:[%s26]]
  %s28 = scalar_lea.smem %s0, 14
  %s29 = sld [smem:[%s28]]
  %s30 = scalar_lea.smem %s0, 15
  %s31 = sld [smem:[%s30]]
  %s32 = scalar_lea.smem %s0, 16
  %s33 = sld [smem:[%s32]]
  %s34 = scalar_lea.smem %s0, 17
  %s35 = sld [smem:[%s34]]
  %s36 = scalar_lea.smem %s0, 18
  %s37 = sld [smem:[%s36]]
  %s38 = scalar_lea.smem %s0, 19
  %s39 = sld [smem:[%s38]]
  %s40 = scalar_lea.smem %s0, 20
  %s41 = sld [smem:[%s40]]
  %s42 = scalar_lea.smem %s0, 21
  %s43 = sld [smem:[%s42]]
  %s44 = scalar_lea.smem %s0, 22
  %s45 = sld [smem:[%s44]]
  %s46 = scalar_lea.smem %s0, 23
  %s47 = sld [smem:[%s46]]
  %s48 = scalar_lea.smem %s0, 24
  %s49 = sld [smem:[%s48]]
  %s50 = scalar_lea.smem %s0, 25
  %s51 = sld [smem:[%s50]]
  %s52 = scalar_lea.smem %s0, 26
  %s53 = sld [smem:[%s52]]
  %s54 = scalar_lea.smem %s0, 27
  %s55 = sld [smem:[%s54]]
  %s56 = scalar_lea.smem %s0, 28
  %s57 = sld [smem:[%s56]]
  %s58 = scalar_lea.smem %s0, 29
  %s59 = sld [smem:[%s58]]
  %s60 = scalar_lea.smem %s0, 30
  %s61 = sld [smem:[%s60]]
  %s62 = scalar_lea.smem %s0, 31
  %s63 = sld [smem:[%s62]]
  %s64 = scalar_lea.smem %s0, 32
  %s65 = sld [smem:[%s64]]
  %s66 = sld [smem:[#allocation0]]
  $region138: #{forward.1} parent=0
    _
  %s68 = ssub.s32 1, %s66
  %s69 = scalar_select 0, %s68, %s66
  // Predicated region
  $region2: #{forward.1} parent=0 // pred_check
    _
  $region3: #{forward.1} parent=0 // pred_check_branch
    %71 = sbr.rel (0) target = $region5
  $region4: #{forward.1} parent=0 // pred_region
    _
  $region5: #{forward.1} parent=0 // pred_fallthru
    _
  // Predicated region
  $region6: #{forward.1} parent=0 // pred_check
    _
  $region7: #{forward.1} parent=0 // pred_check_branch
    %73 = sbr.rel (0) target = $region9
  $region8: #{forward.1} parent=0 // pred_region
    _
  $region9: #{forward.1} parent=0 // pred_fallthru
    _
  // Predicated region
  $region10: #{forward.1} parent=0 // pred_check
    _
  $region11: #{forward.1} parent=0 // pred_check_branch
    %75 = sbr.rel (0) target = $region13
  $region12: #{forward.1} parent=0 // pred_region
    _
  $region13: #{forward.1} parent=0 // pred_fallthru
    _
  // Predicated region
  $region14: #{forward.1} parent=0 // pred_check
    _
  $region15: #{forward.1} parent=0 // pred_check_branch
    %77 = sbr.rel (0) target = $region17
  $region16: #{forward.1} parent=0 // pred_region
    _
  $region17: #{forward.1} parent=0 // pred_fallthru
    _
  // Predicated region
  $region18: #{forward.1} parent=0 // pred_check
    _
  $region19: #{forward.1} parent=0 // pred_check_branch
    %79 = sbr.rel (0) target = $region21
  $region20: #{forward.1} parent=0 // pred_region
    _
  $region21: #{forward.1} parent=0 // pred_fallthru
    _
  // Predicated region
  $region22: #{forward.1} parent=0 // pred_check
    _
  $region23: #{forward.1} parent=0 // pred_check_branch
    %81 = sbr.rel (0) target = $region25
  $region24: #{forward.1} parent=0 // pred_region
    _
  $region25: #{forward.1} parent=0 // pred_fallthru
    _
  // Predicated region
  $region26: #{forward.1} parent=0 // pred_check
    _
  $region27: #{forward.1} parent=0 // pred_check_branch
    %83 = sbr.rel (0) target = $region29
  $region28: #{forward.1} parent=0 // pred_region
    _
  $region29: #{forward.1} parent=0 // pred_fallthru
    _
  // Predicated region
  $region30: #{forward.1} parent=0 // pred_check
    _
  $region31: #{forward.1} parent=0 // pred_check_branch
    %85 = sbr.rel (0) target = $region33
  $region32: #{forward.1} parent=0 // pred_region
    _
  $region33: #{forward.1} parent=0 // pred_fallthru
    _
  // Predicated region
  $region34: #{forward.1} parent=0 // pred_check
    _
  $region35: #{forward.1} parent=0 // pred_check_branch
    %87 = sbr.rel (0) target = $region37
  $region36: #{forward.1} parent=0 // pred_region
    _
  $region37: #{forward.1} parent=0 // pred_fallthru
    _
  // Predicated region
  $region38: #{forward.1} parent=0 // pred_check
    _
  $region39: #{forward.1} parent=0 // pred_check_branch
    %89 = sbr.rel (0) target = $region41
  $region40: #{forward.1} parent=0 // pred_region
    _
  $region41: #{forward.1} parent=0 // pred_fallthru
    _
  // Predicated region
  $region42: #{forward.1} parent=0 // pred_check
    _
  $region43: #{forward.1} parent=0 // pred_check_branch
    %91 = sbr.rel (0) target = $region45
  $region44: #{forward.1} parent=0 // pred_region
    _
  $region45: #{forward.1} parent=0 // pred_fallthru
    _
  // Predicated region
  $region46: #{forward.1} parent=0 // pred_check
    _
  $region47: #{forward.1} parent=0 // pred_check_branch
    %93 = sbr.rel (0) target = $region49
  $region48: #{forward.1} parent=0 // pred_region
    _
  $region49: #{forward.1} parent=0 // pred_fallthru
    _
  // Predicated region
  $region50: #{forward.1} parent=0 // pred_check
    _
  $region51: #{forward.1} parent=0 // pred_check_branch
    %95 = sbr.rel (0) target = $region53
  $region52: #{forward.1} parent=0 // pred_region
    _
  $region53: #{forward.1} parent=0 // pred_fallthru
    _
  // Predicated region
  $region54: #{forward.1} parent=0 // pred_check
    _
  $region55: #{forward.1} parent=0 // pred_check_branch
    %97 = sbr.rel (0) target = $region57
  $region56: #{forward.1} parent=0 // pred_region
    _
  $region57: #{forward.1} parent=0 // pred_fallthru
    _
  // Predicated region
  $region58: #{forward.1} parent=0 // pred_check
    _
  $region59: #{forward.1} parent=0 // pred_check_branch
    %99 = sbr.rel (0) target = $region61
  $region60: #{forward.1} parent=0 // pred_region
    _
  $region61: #{forward.1} parent=0 // pred_fallthru
    _
  // Predicated region
  $region62: #{forward.1} parent=0 // pred_check
    _
  $region63: #{forward.1} parent=0 // pred_check_branch
    %101 = sbr.rel (0) target = $region65
  $region64: #{forward.1} parent=0 // pred_region
    _
  $region65: #{forward.1} parent=0 // pred_fallthru
    _
  // Predicated region
  $region66: #{forward.1} parent=0 // pred_check
    _
  $region67: #{forward.1} parent=0 // pred_check_branch
    %103 = sbr.rel (0) target = $region69
  $region68: #{forward.1} parent=0 // pred_region
    _
  $region69: #{forward.1} parent=0 // pred_fallthru
    _
  // Predicated region
  $region70: #{forward.1} parent=0 // pred_check
    _
  $region71: #{forward.1} parent=0 // pred_check_branch
    %105 = sbr.rel (0) target = $region73
  $region72: #{forward.1} parent=0 // pred_region
    _
  $region73: #{forward.1} parent=0 // pred_fallthru
    _
  // Predicated region
  $region74: #{forward.1} parent=0 // pred_check
    _
  $region75: #{forward.1} parent=0 // pred_check_branch
    %107 = sbr.rel (0) target = $region77
  $region76: #{forward.1} parent=0 // pred_region
    _
  $region77: #{forward.1} parent=0 // pred_fallthru
    _
  // Predicated region
  $region78: #{forward.1} parent=0 // pred_check
    _
  $region79: #{forward.1} parent=0 // pred_check_branch
    %109 = sbr.rel (0) target = $region81
  $region80: #{forward.1} parent=0 // pred_region
    _
  $region81: #{forward.1} parent=0 // pred_fallthru
    _
  // Predicated region
  $region82: #{forward.1} parent=0 // pred_check
    _
  $region83: #{forward.1} parent=0 // pred_check_branch
    %111 = sbr.rel (0) target = $region85
  $region84: #{forward.1} parent=0 // pred_region
    _
  $region85: #{forward.1} parent=0 // pred_fallthru
    _
  // Predicated region
  $region86: #{forward.1} parent=0 // pred_check
    _
  $region87: #{forward.1} parent=0 // pred_check_branch
    %113 = sbr.rel (0) target = $region89
  $region88: #{forward.1} parent=0 // pred_region
    _
  $region89: #{forward.1} parent=0 // pred_fallthru
    _
  // Predicated region
  $region90: #{forward.1} parent=0 // pred_check
    _
  $region91: #{forward.1} parent=0 // pred_check_branch
    %115 = sbr.rel (0) target = $region93
  $region92: #{forward.1} parent=0 // pred_region
    _
  $region93: #{forward.1} parent=0 // pred_fallthru
    _
  // Predicated region
  $region94: #{forward.1} parent=0 // pred_check
    _
  $region95: #{forward.1} parent=0 // pred_check_branch
    %117 = sbr.rel (0) target = $region97
  $region96: #{forward.1} parent=0 // pred_region
    _
  $region97: #{forward.1} parent=0 // pred_fallthru
    _
  // Predicated region
  $region98: #{forward.1} parent=0 // pred_check
    _
  $region99: #{forward.1} parent=0 // pred_check_branch
    %119 = sbr.rel (0) target = $region101
  $region100: #{forward.1} parent=0 // pred_region
    _
  $region101: #{forward.1} parent=0 // pred_fallthru
    _
  // Predicated region
  $region102: #{forward.1} parent=0 // pred_check
    _
  $region103: #{forward.1} parent=0 // pred_check_branch
    %121 = sbr.rel (0) target = $region105
  $region104: #{forward.1} parent=0 // pred_region
    _
  $region105: #{forward.1} parent=0 // pred_fallthru
    _
  // Predicated region
  $region106: #{forward.1} parent=0 // pred_check
    _
  $region107: #{forward.1} parent=0 // pred_check_branch
    %123 = sbr.rel (0) target = $region109
  $region108: #{forward.1} parent=0 // pred_region
    _
  $region109: #{forward.1} parent=0 // pred_fallthru
    _
  // Predicated region
  $region110: #{forward.1} parent=0 // pred_check
    _
  $region111: #{forward.1} parent=0 // pred_check_branch
    %125 = sbr.rel (0) target = $region113
  $region112: #{forward.1} parent=0 // pred_region
    _
  $region113: #{forward.1} parent=0 // pred_fallthru
    _
  // Predicated region
  $region114: #{forward.1} parent=0 // pred_check
    _
  $region115: #{forward.1} parent=0 // pred_check_branch
    %127 = sbr.rel (0) target = $region117
  $region116: #{forward.1} parent=0 // pred_region
    _
  $region117: #{forward.1} parent=0 // pred_fallthru
    _
  // Predicated region
  $region118: #{forward.1} parent=0 // pred_check
    _
  $region119: #{forward.1} parent=0 // pred_check_branch
    %129 = sbr.rel (0) target = $region121
  $region120: #{forward.1} parent=0 // pred_region
    _
  $region121: #{forward.1} parent=0 // pred_fallthru
    _
  // Predicated region
  $region122: #{forward.1} parent=0 // pred_check
    _
  $region123: #{forward.1} parent=0 // pred_check_branch
    %131 = sbr.rel (0) target = $region125
  $region124: #{forward.1} parent=0 // pred_region
    _
  $region125: #{forward.1} parent=0 // pred_fallthru
    _
  // Predicated region
  $region126: #{forward.1} parent=0 // pred_check
    _
  $region127: #{forward.1} parent=0 // pred_check_branch
    %133 = sbr.rel (0) target = $region129
  $region128: #{forward.1} parent=0 // pred_region
    _
  $region129: #{forward.1} parent=0 // pred_fallthru
    _
  %v135 = vld [vmem:[%s1] sm:$0xff]
  %v136 = vld [vmem:[%s1 + $0x8] sm:$0xff]
  %v137 = vld [vmem:[%s1 + $0x10] sm:$0xff]
  %v138 = vld [vmem:[%s1 + $0x18] sm:$0xff]
  %v139 = vpack.c.bf16 %v136, %v135
  %v140 = vpack.c.bf16 %v138, %v137
  %v141 = vld [vmem:[%s9] sm:$0xf]
  %v142 = vld [vmem:[%s9 + $0x4] sm:$0xf]
  %v143 = vld [vmem:[%s9 + $0x8] sm:$0xf]
  %v144 = vld [vmem:[%s9 + $0xc] sm:$0xf]
  %v145 = vld [vmem:[%s9 + $0x10] sm:$0xf]
  %v146 = vld [vmem:[%s9 + $0x14] sm:$0xf]
  %v147 = vld [vmem:[%s11] sm:$0x1]
  %v149 = vperm.slane %v147, 0
  %v157 = vunpack.c.l.b16 %v141
  %v158 = vunpack.c.l.b16 %v142
  %v159 = vunpack.c.l.b16 %v143
  %v160 = vunpack.c.l.b16 %v144
  %v161 = vunpack.c.l.b16 %v145
  %v162 = vunpack.c.l.b16 %v146
  %v163 = vpack.c.b16 %v158, %v157
  %v164 = vpack.c.b16 %v160, %v159
  %v165 = vpack.c.b16 %v162, %v161
  %vm169 = vcmask 392192
  %v171 = vsel %vm169, %v139, 0
  %v174 = vsel %vm169, %v140, 0
  %176 = vmatpush.bf16.msra.mxu0 0
  %177 = vmatpush.bf16.msra.mxu0 0
  %178 = vmatpush.bf16.msra.mxu0 0
  %179 = vmatpush.bf16.msra.mxu0 0
  %180 = vmatpush.bf16.msra.mxu0 0
  %181 = vmatpush.bf16.msra.mxu0 %v165
  %182 = vmatpush.bf16.msra.mxu0 %v164
  %183 = vmatpush.bf16.msra.mxu0 %v163
  %184 = vmatmul.bf16.gmra.mxu0 %v171
  %v185 = vpop.f32.mrf.mxu0
  %v186 = vadd.f32 %v149, %v185
  %v187 = vpop.f32.mrf.mxu0
  %v188 = vadd.f32 %v149, %v187
  %189 = vmatmul.bf16.gmra.mxu0 %v174
  %v190 = vpop.f32.mrf.mxu0
  %v191 = vadd.f32 %v149, %v190
  %v192 = vpop.f32.mrf.mxu0
  %v193 = vadd.f32 %v149, %v192
  %194 = vdwg.mxu0
  %v195 = vmax.f32 %v186, 0.0
  %v196 = vmax.f32 %v188, 0.0
  %v197 = vmax.f32 %v191, 0.0
  %v198 = vmax.f32 %v193, 0.0
  %v199 = vpack.c.bf16 %v196, %v195
  %v200 = vpack.c.bf16 %v198, %v197
  %v201 = vld [vmem:[%s13] sm:$0xf]
  %v202 = vld [vmem:[%s13 + $0x4] sm:$0xf]
  %v203 = vld [vmem:[%s13 + $0x8] sm:$0xf]
  %v204 = vld [vmem:[%s15] sm:$0x1]
  %v206 = vperm.slane %v204, 0
  %v211 = vunpack.c.l.b16 %v201
  %v212 = vunpack.c.l.b16 %v202
  %v213 = vunpack.c.l.b16 %v203
  %v214 = vpack.c.b16 %v212, %v211
  %v215 = vpack.c.b16 %v213, %v213
  %vm217 = vcmask 195584
  %v219 = vsel %vm217, %v199, 0
  %v222 = vsel %vm217, %v200, 0
  %vm224 = vcmask 1043456
  %v226 = vsel %vm224, %v215, 0
  %228 = vmatpush.bf16.msra.mxu0 0
  %229 = vmatpush.bf16.msra.mxu0 0
  %230 = vmatpush.bf16.msra.mxu0 0
  %231 = vmatpush.bf16.msra.mxu0 0
  %232 = vmatpush.bf16.msra.mxu0 0
  %233 = vmatpush.bf16.msra.mxu0 0
  %234 = vmatpush.bf16.msra.mxu0 %v226
  %235 = vmatpush.bf16.msra.mxu0 %v214
  %236 = vmatmul.bf16.gmra.mxu0 %v219
  %v237 = vpop.f32.mrf.mxu0
  %v238 = vadd.f32 %v206, %v237
  %v239 = vpop.f32.mrf.mxu0
  %v240 = vadd.f32 %v206, %v239
  %241 = vmatmul.bf16.gmra.mxu0 %v222
  %v242 = vpop.f32.mrf.mxu0
  %v243 = vadd.f32 %v206, %v242
  %v244 = vpop.f32.mrf.mxu0
  %v245 = vadd.f32 %v206, %v244
  %246 = vdwg.mxu0
  %v247 = vld [vmem:[%s3] sm:$0xff]
  %v248 = vld [vmem:[%s3 + $0x8] sm:$0xff]
  %v249 = vld [vmem:[%s3 + $0x10] sm:$0xff]
  %v250 = vld [vmem:[%s3 + $0x18] sm:$0xff]
  %v251 = vld [vmem:[%s3 + $0x20] sm:$0xff]
  %v252 = vld [vmem:[%s3 + $0x28] sm:$0xff]
  %v253 = vld [vmem:[%s3 + $0x30] sm:$0xff]
  %v254 = vld [vmem:[%s3 + $0x38] sm:$0xff]
  %v255 = vpack.c.bf16 %v249, %v247
  %v256 = vpack.c.bf16 %v250, %v248
  %v257 = vpack.c.bf16 %v253, %v251
  %v258 = vpack.c.bf16 %v254, %v252
  %v259 = vld [vmem:[%s17] sm:$0xf]
  %v260 = vld [vmem:[%s17 + $0x4] sm:$0xf]
  %v261 = vld [vmem:[%s17 + $0x8] sm:$0xf]
  %v262 = vld [vmem:[%s17 + $0xc] sm:$0xf]
  %v263 = vld [vmem:[%s17 + $0x10] sm:$0xf]
  %v264 = vld [vmem:[%s17 + $0x14] sm:$0xf]
  %v265 = vld [vmem:[%s17 + $0x18] sm:$0xf]
  %v266 = vld [vmem:[%s17 + $0x1c] sm:$0xf]
  %v267 = vld [vmem:[%s17 + $0x20] sm:$0xf]
  %v268 = vld [vmem:[%s17 + $0x24] sm:$0xf]
  %v269 = vld [vmem:[%s17 + $0x28] sm:$0xf]
  %v270 = vld [vmem:[%s17 + $0x2c] sm:$0xf]
  %v271 = vld [vmem:[%s17 + $0x30] sm:$0xf]
  %v272 = vld [vmem:[%s17 + $0x34] sm:$0xf]
  %v273 = vld [vmem:[%s17 + $0x38] sm:$0xf]
  %v274 = vld [vmem:[%s17 + $0x3c] sm:$0xf]
  %v275 = vld [vmem:[%s17 + $0x40] sm:$0xf]
  %v276 = vld [vmem:[%s17 + $0x44] sm:$0xf]
  %v277 = vld [vmem:[%s17 + $0x48] sm:$0xf]
  %v278 = vld [vmem:[%s17 + $0x4c] sm:$0xf]
  %v279 = vld [vmem:[%s17 + $0x50] sm:$0xf]
  %v280 = vld [vmem:[%s17 + $0x54] sm:$0xf]
  %v281 = vld [vmem:[%s17 + $0x58] sm:$0xf]
  %v282 = vld [vmem:[%s17 + $0x5c] sm:$0xf]
  %v283 = vld [vmem:[%s19] sm:$0x1]
  %v285 = vperm.slane %v283, 0
  %v311 = vunpack.c.l.b16 %v259
  %v312 = vunpack.c.l.b16 %v260
  %v313 = vunpack.c.l.b16 %v261
  %v314 = vunpack.c.l.b16 %v262
  %v315 = vunpack.c.l.b16 %v263
  %v316 = vunpack.c.l.b16 %v264
  %v317 = vunpack.c.l.b16 %v265
  %v318 = vunpack.c.l.b16 %v266
  %v319 = vunpack.c.l.b16 %v267
  %v320 = vunpack.c.l.b16 %v268
  %v321 = vunpack.c.l.b16 %v269
  %v322 = vunpack.c.l.b16 %v270
  %v323 = vunpack.c.l.b16 %v271
  %v324 = vunpack.c.l.b16 %v272
  %v325 = vunpack.c.l.b16 %v273
  %v326 = vunpack.c.l.b16 %v274
  %v327 = vunpack.c.l.b16 %v275
  %v328 = vunpack.c.l.b16 %v276
  %v329 = vunpack.c.l.b16 %v277
  %v330 = vunpack.c.l.b16 %v278
  %v331 = vunpack.c.l.b16 %v279
  %v332 = vunpack.c.l.b16 %v280
  %v333 = vunpack.c.l.b16 %v281
  %v334 = vunpack.c.l.b16 %v282
  %v335 = vpack.c.b16 %v312, %v311
  %v336 = vpack.c.b16 %v314, %v313
  %v337 = vpack.c.b16 %v316, %v315
  %v338 = vpack.c.b16 %v318, %v317
  %v339 = vpack.c.b16 %v320, %v319
  %v340 = vpack.c.b16 %v322, %v321
  %v341 = vpack.c.b16 %v324, %v323
  %v342 = vpack.c.b16 %v326, %v325
  %v343 = vpack.c.b16 %v328, %v327
  %v344 = vpack.c.b16 %v330, %v329
  %v345 = vpack.c.b16 %v332, %v331
  %v346 = vpack.c.b16 %v334, %v333
  %vm359 = vcmask 523264
  %v361 = vsel %vm359, %v256, 0
  %v364 = vsel %vm359, %v258, 0
  %366 = vmatpush.bf16.msra.mxu0 %v342
  %367 = vmatpush.bf16.msra.mxu0 %v341
  %368 = vmatpush.bf16.msra.mxu0 %v340
  %369 = vmatpush.bf16.msra.mxu0 %v339
  %370 = vmatpush.bf16.msra.mxu0 %v338
  %371 = vmatpush.bf16.msra.mxu0 %v337
  %372 = vmatpush.bf16.msra.mxu0 %v336
  %373 = vmatpush.bf16.msra.mxu0 %v335
  %374 = vmatmul.bf16.gmra.mxu0 %v255
  %v375 = vpop.f32.mrf.mxu0
  %v376 = vadd.f32 %v285, %v375
  %v377 = vpop.f32.mrf.mxu0
  %v378 = vadd.f32 %v285, %v377
  %379 = vmatmul.bf16.gmra.mxu0 %v257
  %v380 = vpop.f32.mrf.mxu0
  %v381 = vadd.f32 %v285, %v380
  %v382 = vpop.f32.mrf.mxu0
  %v383 = vadd.f32 %v285, %v382
  %384 = vdwg.mxu0
  %385 = vmatpush.bf16.msra.mxu0 0
  %386 = vmatpush.bf16.msra.mxu0 0
  %387 = vmatpush.bf16.msra.mxu0 0
  %388 = vmatpush.bf16.msra.mxu0 0
  %389 = vmatpush.bf16.msra.mxu0 %v346
  %390 = vmatpush.bf16.msra.mxu0 %v345
  %391 = vmatpush.bf16.msra.mxu0 %v344
  %392 = vmatpush.bf16.msra.mxu0 %v343
  %393 = vmatmul.bf16.gmra.mxu0 %v361
  %v394 = vpop.f32.mrf.mxu0
  %v395 = vadd.f32 %v376, %v394
  %v396 = vpop.f32.mrf.mxu0
  %v397 = vadd.f32 %v378, %v396
  %398 = vmatmul.bf16.gmra.mxu0 %v364
  %v399 = vpop.f32.mrf.mxu0
  %v400 = vadd.f32 %v381, %v399
  %v401 = vpop.f32.mrf.mxu0
  %v402 = vadd.f32 %v383, %v401
  %403 = vdwg.mxu0
  %v404 = vmax.f32 %v395, 0.0
  %v405 = vmax.f32 %v397, 0.0
  %v406 = vmax.f32 %v400, 0.0
  %v407 = vmax.f32 %v402, 0.0
  %v408 = vpack.c.bf16 %v405, %v404
  %v409 = vpack.c.bf16 %v407, %v406
  %v410 = vld [vmem:[%s21] sm:$0xf]
  %v411 = vld [vmem:[%s21 + $0x4] sm:$0xf]
  %v412 = vld [vmem:[%s21 + $0x8] sm:$0xf]
  %v413 = vld [vmem:[%s21 + $0xc] sm:$0xf]
  %v414 = vld [vmem:[%s21 + $0x10] sm:$0xf]
  %v415 = vld [vmem:[%s21 + $0x14] sm:$0xf]
  %v416 = vld [vmem:[%s21 + $0x18] sm:$0xf]
  %v417 = vld [vmem:[%s21 + $0x1c] sm:$0xf]
  %v418 = vld [vmem:[%s21 + $0x20] sm:$0xf]
  %v419 = vld [vmem:[%s21 + $0x24] sm:$0xf]
  %v420 = vld [vmem:[%s21 + $0x28] sm:$0xf]
  %v421 = vld [vmem:[%s21 + $0x2c] sm:$0xf]
  %v422 = vld [vmem:[%s23] sm:$0x1]
  %v424 = vperm.slane %v422, 0
  %v438 = vunpack.c.l.b16 %v410
  %v439 = vunpack.c.l.b16 %v411
  %v440 = vunpack.c.l.b16 %v412
  %v441 = vunpack.c.l.b16 %v413
  %v442 = vunpack.c.l.b16 %v414
  %v443 = vunpack.c.l.b16 %v415
  %v444 = vunpack.c.l.b16 %v416
  %v445 = vunpack.c.l.b16 %v417
  %v446 = vunpack.c.l.b16 %v418
  %v447 = vunpack.c.l.b16 %v419
  %v448 = vunpack.c.l.b16 %v420
  %v449 = vunpack.c.l.b16 %v421
  %v450 = vpack.c.b16 %v439, %v438
  %v451 = vpack.c.b16 %v441, %v440
  %v452 = vpack.c.b16 %v443, %v442
  %v453 = vpack.c.b16 %v445, %v444
  %v454 = vpack.c.b16 %v447, %v446
  %v455 = vpack.c.b16 %v449, %v448
  %vm462 = vcmask 785408
  %v464 = vsel %vm462, %v408, 0
  %v467 = vsel %vm462, %v409, 0
  %469 = vmatpush.bf16.msra.mxu0 0
  %470 = vmatpush.bf16.msra.mxu0 0
  %471 = vmatpush.bf16.msra.mxu0 %v455
  %472 = vmatpush.bf16.msra.mxu0 %v454
  %473 = vmatpush.bf16.msra.mxu0 %v453
  %474 = vmatpush.bf16.msra.mxu0 %v452
  %475 = vmatpush.bf16.msra.mxu0 %v451
  %476 = vmatpush.bf16.msra.mxu0 %v450
  %477 = vmatmul.bf16.gmra.mxu0 %v464
  %v478 = vpop.f32.mrf.mxu0
  %v479 = vadd.f32 %v424, %v478
  %v480 = vpop.f32.mrf.mxu0
  %v481 = vadd.f32 %v424, %v480
  %482 = vmatmul.bf16.gmra.mxu0 %v467
  %v483 = vpop.f32.mrf.mxu0
  %v484 = vadd.f32 %v424, %v483
  %v485 = vpop.f32.mrf.mxu0
  %v486 = vadd.f32 %v424, %v485
  %487 = vdwg.mxu0
  %v488 = vmax.f32 %v479, 0.0
  %v489 = vmax.f32 %v481, 0.0
  %v490 = vmax.f32 %v484, 0.0
  %v491 = vmax.f32 %v486, 0.0
  %v492 = vpack.c.bf16 %v489, %v488
  %v493 = vpack.c.bf16 %v491, %v490
  %v494 = vld [vmem:[%s25] sm:$0xf]
  %v495 = vld [vmem:[%s25 + $0x4] sm:$0xf]
  %v496 = vld [vmem:[%s25 + $0x8] sm:$0xf]
  %v497 = vld [vmem:[%s25 + $0xc] sm:$0xf]
  %v498 = vld [vmem:[%s25 + $0x10] sm:$0xf]
  %v499 = vld [vmem:[%s25 + $0x14] sm:$0xf]
  %v500 = vld [vmem:[%s27] sm:$0x1]
  %v502 = vperm.slane %v500, 0
  %v510 = vunpack.c.l.b16 %v494
  %v511 = vunpack.c.l.b16 %v495
  %v512 = vunpack.c.l.b16 %v496
  %v513 = vunpack.c.l.b16 %v497
  %v514 = vunpack.c.l.b16 %v498
  %v515 = vunpack.c.l.b16 %v499
  %v516 = vpack.c.b16 %v511, %v510
  %v517 = vpack.c.b16 %v513, %v512
  %v518 = vpack.c.b16 %v515, %v514
  %v523 = vsel %vm169, %v492, 0
  %v526 = vsel %vm169, %v493, 0
  %528 = vmatpush.bf16.msra.mxu0 0
  %529 = vmatpush.bf16.msra.mxu0 0
  %530 = vmatpush.bf16.msra.mxu0 0
  %531 = vmatpush.bf16.msra.mxu0 0
  %532 = vmatpush.bf16.msra.mxu0 0
  %533 = vmatpush.bf16.msra.mxu0 %v518
  %534 = vmatpush.bf16.msra.mxu0 %v517
  %535 = vmatpush.bf16.msra.mxu0 %v516
  %536 = vmatmul.bf16.gmra.mxu0 %v523
  %v537 = vpop.f32.mrf.mxu0
  %v538 = vadd.f32 %v502, %v537
  %v539 = vpop.f32.mrf.mxu0
  %v540 = vadd.f32 %v502, %v539
  %541 = vmatmul.bf16.gmra.mxu0 %v526
  %v542 = vpop.f32.mrf.mxu0
  %v543 = vadd.f32 %v502, %v542
  %v544 = vpop.f32.mrf.mxu0
  %v545 = vadd.f32 %v502, %v544
  %546 = vdwg.mxu0
  %v547 = vld [vmem:[%s5] sm:$0xff]
  %v548 = vld [vmem:[%s5 + $0x8] sm:$0xff]
  %v549 = vld [vmem:[%s7] sm:$0xff]
  %v550 = vld [vmem:[%s7 + $0x8] sm:$0xff]
  %v551 = vadd.f32 %v538, %v549
  %v552 = vadd.f32 %v540, %v550
  %v553 = vadd.f32 %v543, %v549
  %v554 = vadd.f32 %v545, %v550
  %v555 = vadd.f32 %v238, %v547
  %v556 = vadd.f32 %v240, %v548
  %v557 = vadd.f32 %v243, %v547
  %v558 = vadd.f32 %v245, %v548
  %v559 = vpack.c.bf16 %v552, %v551
  %v560 = vpack.c.bf16 %v554, %v553
  %v561 = vld [vmem:[%s29] sm:$0xf]
  %v562 = vld [vmem:[%s29 + $0x4] sm:$0xf]
  %v563 = vld [vmem:[%s29 + $0x8] sm:$0xf]
  %v564 = vld [vmem:[%s29 + $0xc] sm:$0xf]
  %v565 = vld [vmem:[%s31] sm:$0x1]
  %v567 = vperm.slane %v565, 0
  %v573 = vunpack.c.l.b16 %v561
  %v574 = vunpack.c.l.b16 %v562
  %v575 = vunpack.c.l.b16 %v563
  %v576 = vunpack.c.l.b16 %v564
  %v577 = vpack.c.b16 %v574, %v573
  %v578 = vpack.c.b16 %v576, %v575
  %vm581 = vcmask 261120
  %v583 = vsel %vm581, %v559, 0
  %v586 = vsel %vm581, %v560, 0
  %588 = vmatpush.bf16.msra.mxu0 0
  %589 = vmatpush.bf16.msra.mxu0 0
  %590 = vmatpush.bf16.msra.mxu0 0
  %591 = vmatpush.bf16.msra.mxu0 0
  %592 = vmatpush.bf16.msra.mxu0 0
  %593 = vmatpush.bf16.msra.mxu0 0
  %594 = vmatpush.bf16.msra.mxu0 %v578
  %595 = vmatpush.bf16.msra.mxu0 %v577
  %596 = vmatmul.bf16.gmra.mxu0 %v583
  %v597 = vpop.f32.mrf.mxu0
  %v598 = vadd.f32 %v567, %v597
  %v599 = vpop.f32.mrf.mxu0
  %v600 = vadd.f32 %v567, %v599
  %601 = vmatmul.bf16.gmra.mxu0 %v586
  %v602 = vpop.f32.mrf.mxu0
  %v603 = vadd.f32 %v567, %v602
  %v604 = vpop.f32.mrf.mxu0
  %v605 = vadd.f32 %v567, %v604
  %606 = vdwg.mxu0
  %v607 = vpack.c.bf16 %v556, %v555
  %v608 = vpack.c.bf16 %v558, %v557
  %v609 = vld [vmem:[%s33] sm:$0xf]
  %v610 = vld [vmem:[%s33 + $0x4] sm:$0xf]
  %v611 = vld [vmem:[%s33 + $0x8] sm:$0xf]
  %v612 = vld [vmem:[%s33 + $0xc] sm:$0xf]
  %v613 = vld [vmem:[%s35] sm:$0x1]
  %v615 = vperm.slane %v613, 0
  %v621 = vunpack.c.l.b16 %v609
  %v622 = vunpack.c.l.b16 %v610
  %v623 = vunpack.c.l.b16 %v611
  %v624 = vunpack.c.l.b16 %v612
  %v625 = vpack.c.b16 %v622, %v621
  %v626 = vpack.c.b16 %v624, %v623
  %v630 = vsel %vm581, %v607, 0
  %v633 = vsel %vm581, %v608, 0
  %635 = vmatpush.bf16.msra.mxu0 0
  %636 = vmatpush.bf16.msra.mxu0 0
  %637 = vmatpush.bf16.msra.mxu0 0
  %638 = vmatpush.bf16.msra.mxu0 0
  %639 = vmatpush.bf16.msra.mxu0 0
  %640 = vmatpush.bf16.msra.mxu0 0
  %641 = vmatpush.bf16.msra.mxu0 %v626
  %642 = vmatpush.bf16.msra.mxu0 %v625
  %643 = vmatmul.bf16.gmra.mxu0 %v630
  %v644 = vpop.f32.mrf.mxu0
  %v645 = vadd.f32 %v615, %v644
  %v646 = vpop.f32.mrf.mxu0
  %v647 = vadd.f32 %v615, %v646
  %648 = vmatmul.bf16.gmra.mxu0 %v633
  %v649 = vpop.f32.mrf.mxu0
  %v650 = vadd.f32 %v615, %v649
  %v651 = vpop.f32.mrf.mxu0
  %v652 = vadd.f32 %v615, %v651
  %653 = vdwg.mxu0
  %v654 = vpack.c.bf16 %v240, %v238
  %v655 = vpack.c.bf16 %v245, %v243
  %v656 = vld [vmem:[%s37] sm:$0xf]
  %v657 = vld [vmem:[%s37 + $0x4] sm:$0xf]
  %v658 = vld [vmem:[%s37 + $0x8] sm:$0xf]
  %v659 = vld [vmem:[%s37 + $0xc] sm:$0xf]
  %v660 = vld [vmem:[%s39] sm:$0x1]
  %v662 = vperm.slane %v660, 0
  %v668 = vunpack.c.l.b16 %v656
  %v669 = vunpack.c.l.b16 %v657
  %v670 = vunpack.c.l.b16 %v658
  %v671 = vunpack.c.l.b16 %v659
  %v672 = vpack.c.b16 %v669, %v668
  %v673 = vpack.c.b16 %v671, %v670
  %v677 = vsel %vm581, %v654, 0
  %v680 = vsel %vm581, %v655, 0
  %682 = vmatpush.bf16.msra.mxu0 0
  %683 = vmatpush.bf16.msra.mxu0 0
  %684 = vmatpush.bf16.msra.mxu0 0
  %685 = vmatpush.bf16.msra.mxu0 0
  %686 = vmatpush.bf16.msra.mxu0 0
  %687 = vmatpush.bf16.msra.mxu0 0
  %688 = vmatpush.bf16.msra.mxu0 %v673
  %689 = vmatpush.bf16.msra.mxu0 %v672
  %690 = vmatmul.bf16.gmra.mxu0 %v677
  %v691 = vpop.f32.mrf.mxu0
  %v692 = vadd.f32 %v662, %v691
  %v693 = vpop.f32.mrf.mxu0
  %v694 = vadd.f32 %v662, %v693
  %695 = vmatmul.bf16.gmra.mxu0 %v680
  %v696 = vpop.f32.mrf.mxu0
  %v697 = vadd.f32 %v662, %v696
  %v698 = vpop.f32.mrf.mxu0
  %v699 = vadd.f32 %v662, %v698
  %700 = vdwg.mxu0
  %v701 = vpack.c.bf16 %v598, %v598
  %v702 = vpack.c.bf16 %v600, %v600
  %v703 = vpack.c.bf16 %v603, %v603
  %v704 = vpack.c.bf16 %v605, %v605
  %v705 = vpack.c.bf16 %v645, %v645
  %v706 = vpack.c.bf16 %v647, %v647
  %v707 = vpack.c.bf16 %v650, %v650
  %v708 = vpack.c.bf16 %v652, %v652
  %v711 = vunpack.c.l.b16 %v701
  %v712 = vunpack.c.l.b16 %v702
  %v713 = vpack.c.b16 %v712, %v711
  %v716 = vunpack.c.l.b16 %v705
  %v717 = vunpack.c.l.b16 %v706
  %v718 = vpack.c.b16 %v717, %v716
  %v720 = vsel %vm581, %v713, 0
  %v723 = vsel %vm581, %v718, 0
  %725 = vmatpush.bf16.xpose.msra.mxu0 0
  %726 = vmatpush.bf16.xpose.msra.mxu0 0
  %727 = vmatpush.bf16.xpose.msra.mxu0 0
  %728 = vmatpush.bf16.xpose.msra.mxu0 0
  %729 = vmatpush.bf16.xpose.msra.mxu0 0
  %730 = vmatpush.bf16.xpose.msra.mxu0 0
  %731 = vmatpush.bf16.xpose.msra.mxu0 0
  %732 = vmatpush.bf16.xpose.msra.mxu0 %v723
  %733 = vmatmul.bf16.gmra.mxu0 %v720
  %v734 = vpop.f32.mrf.mxu0
  %v735 = vadd.f32 0.0, %v734
  %v736 = vpop.f32.mrf.mxu0
  %v737 = vadd.f32 0.0, %v736
  %738 = vdwg.mxu0
  %v741 = vunpack.c.l.b16 %v703
  %v742 = vunpack.c.l.b16 %v704
  %v743 = vpack.c.b16 %v742, %v741
  %v746 = vunpack.c.l.b16 %v707
  %v747 = vunpack.c.l.b16 %v708
  %v748 = vpack.c.b16 %v747, %v746
  %v750 = vsel %vm581, %v743, 0
  %v753 = vsel %vm581, %v748, 0
  %755 = vmatpush.bf16.xpose.msra.mxu0 0
  %756 = vmatpush.bf16.xpose.msra.mxu0 0
  %757 = vmatpush.bf16.xpose.msra.mxu0 0
  %758 = vmatpush.bf16.xpose.msra.mxu0 0
  %759 = vmatpush.bf16.xpose.msra.mxu0 0
  %760 = vmatpush.bf16.xpose.msra.mxu0 0
  %761 = vmatpush.bf16.xpose.msra.mxu0 0
  %762 = vmatpush.bf16.xpose.msra.mxu0 %v753
  %763 = vmatmul.bf16.gmra.mxu0 %v750
  %v764 = vpop.f32.mrf.mxu0
  %v765 = vadd.f32 0.0, %v764
  %v766 = vpop.f32.mrf.mxu0
  %v767 = vadd.f32 0.0, %v766
  %768 = vdwg.mxu0
  %vm769 = vcmask 130048
  %v770 = vsel %vm769, %v735, -inf
  %771 = vmax.xlane.f32.xlu0 %v770
  %v772 = vpop.xlane.xlu0 %771
  %v773 = vsel %vm769, %v737, -inf
  %774 = vmax.xlane.f32.xlu0 %v773
  %v775 = vpop.xlane.xlu0 %774
  %v776 = vsel %vm769, %v765, -inf
  %777 = vmax.xlane.f32.xlu0 %v776
  %v778 = vpop.xlane.xlu0 %777
  %v779 = vsel %vm769, %v767, -inf
  %780 = vmax.xlane.f32.xlu0 %v779
  %v781 = vpop.xlane.xlu0 %780
  %v782 = vsub.f32 %v735, %v772
  %v783 = vsub.f32 %v737, %v775
  %v784 = vsub.f32 %v765, %v778
  %v785 = vsub.f32 %v767, %v781
  %v786 = vmul.f32 %v782, 1.442695
  %v787 = vpow.pop %v786
  %v788 = vmul.f32 %v783, 1.442695
  %v789 = vpow.pop %v788
  %v790 = vmul.f32 %v784, 1.442695
  %v791 = vpow.pop %v790
  %v792 = vmul.f32 %v785, 1.442695
  %v793 = vpow.pop %v792
  %v794 = vsel %vm769, %v787, 0.0
  %795 = vadd.xlane.f32.xlu0 %v794
  %v796 = vpop.xlane.xlu0 %795
  %v797 = vsel %vm769, %v789, 0.0
  %798 = vadd.xlane.f32.xlu0 %v797
  %v799 = vpop.xlane.xlu0 %798
  %v800 = vsel %vm769, %v791, 0.0
  %801 = vadd.xlane.f32.xlu0 %v800
  %v802 = vpop.xlane.xlu0 %801
  %v803 = vsel %vm769, %v793, 0.0
  %804 = vadd.xlane.f32.xlu0 %v803
  %v805 = vpop.xlane.xlu0 %804
  %v806 = vrcp.pop %v796
  %v807 = vrcp.pop %v799
  %v808 = vrcp.pop %v802
  %v809 = vrcp.pop %v805
  %v810 = vmul.f32 %v787, %v806
  %v811 = vmul.f32 %v789, %v807
  %v812 = vmul.f32 %v791, %v808
  %v813 = vmul.f32 %v793, %v809
  %v814 = vpack.c.bf16 %v810, %v810
  %v815 = vpack.c.bf16 %v811, %v811
  %v816 = vpack.c.bf16 %v812, %v812
  %v817 = vpack.c.bf16 %v813, %v813
  %v818 = vpack.c.bf16 %v692, %v692
  %v819 = vpack.c.bf16 %v694, %v694
  %v820 = vpack.c.bf16 %v697, %v697
  %v821 = vpack.c.bf16 %v699, %v699
  %v824 = vunpack.c.l.b16 %v814
  %v825 = vunpack.c.l.b16 %v815
  %v826 = vpack.c.b16 %v825, %v824
  %v829 = vunpack.c.l.b16 %v818
  %v830 = vunpack.c.l.b16 %v819
  %v831 = vpack.c.b16 %v830, %v829
  %v834 = vsel %vm769, %v826, 0
  %836 = vmatpush.bf16.msra.mxu0 0
  %837 = vmatpush.bf16.msra.mxu0 0
  %838 = vmatpush.bf16.msra.mxu0 0
  %839 = vmatpush.bf16.msra.mxu0 0
  %840 = vmatpush.bf16.msra.mxu0 0
  %841 = vmatpush.bf16.msra.mxu0 0
  %842 = vmatpush.bf16.msra.mxu0 0
  %843 = vmatpush.bf16.msra.mxu0 %v831
  %844 = vmatmul.bf16.gmra.mxu0 %v834
  %v845 = vpop.f32.mrf.mxu0
  %v846 = vadd.f32 0.0, %v845
  %v847 = vpop.f32.mrf.mxu0
  %v848 = vadd.f32 0.0, %v847
  %849 = vdwg.mxu0
  %v852 = vunpack.c.l.b16 %v816
  %v853 = vunpack.c.l.b16 %v817
  %v854 = vpack.c.b16 %v853, %v852
  %v857 = vunpack.c.l.b16 %v820
  %v858 = vunpack.c.l.b16 %v821
  %v859 = vpack.c.b16 %v858, %v857
  %v862 = vsel %vm769, %v854, 0
  %864 = vmatpush.bf16.msra.mxu0 0
  %865 = vmatpush.bf16.msra.mxu0 0
  %866 = vmatpush.bf16.msra.mxu0 0
  %867 = vmatpush.bf16.msra.mxu0 0
  %868 = vmatpush.bf16.msra.mxu0 0
  %869 = vmatpush.bf16.msra.mxu0 0
  %870 = vmatpush.bf16.msra.mxu0 0
  %871 = vmatpush.bf16.msra.mxu0 %v859
  %872 = vmatmul.bf16.gmra.mxu0 %v862
  %v873 = vpop.f32.mrf.mxu0
  %v874 = vadd.f32 0.0, %v873
  %v875 = vpop.f32.mrf.mxu0
  %v876 = vadd.f32 0.0, %v875
  %877 = vdwg.mxu0
  %v878 = vpack.c.bf16 %v848, %v846
  %v879 = vpack.c.bf16 %v876, %v874
  %v880 = vld [vmem:[%s41] sm:$0xf]
  %v881 = vld [vmem:[%s41 + $0x4] sm:$0xf]
  %v882 = vld [vmem:[%s41 + $0x8] sm:$0xf]
  %v883 = vld [vmem:[%s41 + $0xc] sm:$0xf]
  %v884 = vld [vmem:[%s43] sm:$0x1]
  %v886 = vperm.slane %v884, 0
  %v892 = vunpack.c.l.b16 %v880
  %v893 = vunpack.c.l.b16 %v881
  %v894 = vunpack.c.l.b16 %v882
  %v895 = vunpack.c.l.b16 %v883
  %v896 = vpack.c.b16 %v893, %v892
  %v897 = vpack.c.b16 %v895, %v894
  %v901 = vsel %vm581, %v878, 0
  %v904 = vsel %vm581, %v879, 0
  %906 = vmatpush.bf16.msra.mxu0 0
  %907 = vmatpush.bf16.msra.mxu0 0
  %908 = vmatpush.bf16.msra.mxu0 0
  %909 = vmatpush.bf16.msra.mxu0 0
  %910 = vmatpush.bf16.msra.mxu0 0
  %911 = vmatpush.bf16.msra.mxu0 0
  %912 = vmatpush.bf16.msra.mxu0 %v897
  %913 = vmatpush.bf16.msra.mxu0 %v896
  %914 = vmatmul.bf16.gmra.mxu0 %v901
  %v915 = vpop.f32.mrf.mxu0
  %v916 = vadd.f32 %v886, %v915
  %v917 = vpop.f32.mrf.mxu0
  %v918 = vadd.f32 %v886, %v917
  %919 = vmatmul.bf16.gmra.mxu0 %v904
  %v920 = vpop.f32.mrf.mxu0
  %v921 = vadd.f32 %v886, %v920
  %v922 = vpop.f32.mrf.mxu0
  %v923 = vadd.f32 %v886, %v922
  %924 = vdwg.mxu0
  %v925 = vadd.f32 %v538, %v916
  %v926 = vadd.f32 %v540, %v918
  %v927 = vadd.f32 %v543, %v921
  %v928 = vadd.f32 %v545, %v923
  %v929 = vpack.c.bf16 %v926, %v925
  %v930 = vpack.c.bf16 %v928, %v927
  %v931 = vld [vmem:[%s45] sm:$0xf]
  %v932 = vld [vmem:[%s45 + $0x4] sm:$0xf]
  %v933 = vld [vmem:[%s45 + $0x8] sm:$0xf]
  %v934 = vld [vmem:[%s45 + $0xc] sm:$0xf]
  %v935 = vld [vmem:[%s47] sm:$0x1]
  %v937 = vperm.slane %v935, 0
  %v943 = vunpack.c.l.b16 %v931
  %v944 = vunpack.c.l.b16 %v932
  %v945 = vunpack.c.l.b16 %v933
  %v946 = vunpack.c.l.b16 %v934
  %v947 = vpack.c.b16 %v944, %v943
  %v948 = vpack.c.b16 %v946, %v945
  %v952 = vsel %vm581, %v929, 0
  %v955 = vsel %vm581, %v930, 0
  %957 = vmatpush.bf16.msra.mxu0 0
  %958 = vmatpush.bf16.msra.mxu0 0
  %959 = vmatpush.bf16.msra.mxu0 0
  %960 = vmatpush.bf16.msra.mxu0 0
  %961 = vmatpush.bf16.msra.mxu0 0
  %962 = vmatpush.bf16.msra.mxu0 0
  %963 = vmatpush.bf16.msra.mxu0 %v948
  %964 = vmatpush.bf16.msra.mxu0 %v947
  %965 = vmatmul.bf16.gmra.mxu0 %v952
  %v966 = vpop.f32.mrf.mxu0
  %v967 = vadd.f32 %v937, %v966
  %v968 = vpop.f32.mrf.mxu0
  %v969 = vadd.f32 %v937, %v968
  %970 = vmatmul.bf16.gmra.mxu0 %v955
  %v971 = vpop.f32.mrf.mxu0
  %v972 = vadd.f32 %v937, %v971
  %v973 = vpop.f32.mrf.mxu0
  %v974 = vadd.f32 %v937, %v973
  %975 = vdwg.mxu0
  %v976 = vmax.f32 %v967, 0.0
  %v977 = vmax.f32 %v969, 0.0
  %v978 = vmax.f32 %v972, 0.0
  %v979 = vmax.f32 %v974, 0.0
  %v980 = vpack.c.bf16 %v977, %v976
  %v981 = vpack.c.bf16 %v979, %v978
  %v982 = vld [vmem:[%s49] sm:$0xf]
  %v983 = vld [vmem:[%s49 + $0x4] sm:$0xf]
  %v984 = vld [vmem:[%s49 + $0x8] sm:$0xf]
  %v985 = vld [vmem:[%s49 + $0xc] sm:$0xf]
  %v986 = vld [vmem:[%s49 + $0x10] sm:$0xf]
  %v987 = vld [vmem:[%s49 + $0x14] sm:$0xf]
  %v988 = vld [vmem:[%s49 + $0x18] sm:$0xf]
  %v989 = vld [vmem:[%s49 + $0x1c] sm:$0xf]
  %v990 = vld [vmem:[%s51] sm:$0x1]
  %v992 = vperm.slane %v990, 0
  %v1002 = vunpack.c.l.b16 %v982
  %v1003 = vunpack.c.l.b16 %v983
  %v1004 = vunpack.c.l.b16 %v984
  %v1005 = vunpack.c.l.b16 %v985
  %v1006 = vunpack.c.l.b16 %v986
  %v1007 = vunpack.c.l.b16 %v987
  %v1008 = vunpack.c.l.b16 %v988
  %v1009 = vunpack.c.l.b16 %v989
  %v1010 = vpack.c.b16 %v1003, %v1002
  %v1011 = vpack.c.b16 %v1005, %v1004
  %v1012 = vpack.c.b16 %v1007, %v1006
  %v1013 = vpack.c.b16 %v1009, %v1008
  %v1019 = vsel %vm359, %v980, 0
  %v1022 = vsel %vm359, %v981, 0
  %1024 = vmatpush.bf16.msra.mxu0 0
  %1025 = vmatpush.bf16.msra.mxu0 0
  %1026 = vmatpush.bf16.msra.mxu0 0
  %1027 = vmatpush.bf16.msra.mxu0 0
  %1028 = vmatpush.bf16.msra.mxu0 %v1013
  %1029 = vmatpush.bf16.msra.mxu0 %v1012
  %1030 = vmatpush.bf16.msra.mxu0 %v1011
  %1031 = vmatpush.bf16.msra.mxu0 %v1010
  %1032 = vmatmul.bf16.gmra.mxu0 %v1019
  %v1033 = vpop.f32.mrf.mxu0
  %v1034 = vadd.f32 %v992, %v1033
  %v1035 = vpop.f32.mrf.mxu0
  %v1036 = vadd.f32 %v992, %v1035
  %1037 = vmatmul.bf16.gmra.mxu0 %v1022
  %v1038 = vpop.f32.mrf.mxu0
  %v1039 = vadd.f32 %v992, %v1038
  %v1040 = vpop.f32.mrf.mxu0
  %v1041 = vadd.f32 %v992, %v1040
  %1042 = vdwg.mxu0
  %v1043 = vadd.f32 %v925, %v1034
  %v1044 = vadd.f32 %v926, %v1036
  %v1045 = vadd.f32 %v927, %v1039
  %v1046 = vadd.f32 %v928, %v1041
  %v1047 = vpack.c.bf16 %v1044, %v1043
  %v1048 = vpack.c.bf16 %v1046, %v1045
  %v1049 = vld [vmem:[%s53] sm:$0xf]
  %v1050 = vld [vmem:[%s53 + $0x4] sm:$0xf]
  %v1051 = vld [vmem:[%s53 + $0x8] sm:$0xf]
  %v1052 = vld [vmem:[%s53 + $0xc] sm:$0xf]
  %v1053 = vld [vmem:[%s55] sm:$0x1]
  %v1055 = vperm.slane %v1053, 0
  %v1061 = vunpack.c.l.b16 %v1049
  %v1062 = vunpack.c.l.b16 %v1050
  %v1063 = vunpack.c.l.b16 %v1051
  %v1064 = vunpack.c.l.b16 %v1052
  %v1065 = vpack.c.b16 %v1062, %v1061
  %v1066 = vpack.c.b16 %v1064, %v1063
  %v1070 = vsel %vm581, %v1047, 0
  %v1073 = vsel %vm581, %v1048, 0
  %1075 = vmatpush.bf16.msra.mxu0 0
  %1076 = vmatpush.bf16.msra.mxu0 0
  %1077 = vmatpush.bf16.msra.mxu0 0
  %1078 = vmatpush.bf16.msra.mxu0 0
  %1079 = vmatpush.bf16.msra.mxu0 0
  %1080 = vmatpush.bf16.msra.mxu0 0
  %1081 = vmatpush.bf16.msra.mxu0 %v1066
  %1082 = vmatpush.bf16.msra.mxu0 %v1065
  %1083 = vmatmul.bf16.gmra.mxu0 %v1070
  %v1084 = vpop.f32.mrf.mxu0
  %v1085 = vadd.f32 %v1055, %v1084
  %v1086 = vpop.f32.mrf.mxu0
  %v1087 = vadd.f32 %v1055, %v1086
  %1088 = vmatmul.bf16.gmra.mxu0 %v1073
  %v1089 = vpop.f32.mrf.mxu0
  %v1090 = vadd.f32 %v1055, %v1089
  %v1091 = vpop.f32.mrf.mxu0
  %v1092 = vadd.f32 %v1055, %v1091
  %1093 = vdwg.mxu0
  %v1094 = vmax.f32 %v1085, 0.0
  %v1095 = vmax.f32 %v1087, 0.0
  %v1096 = vmax.f32 %v1090, 0.0
  %v1097 = vmax.f32 %v1092, 0.0
  %v1098 = vpack.c.bf16 %v1095, %v1094
  %v1099 = vpack.c.bf16 %v1097, %v1096
  %v1100 = vld [vmem:[%s57] sm:$0xf]
  %v1101 = vld [vmem:[%s57 + $0x4] sm:$0xf]
  %v1102 = vld [vmem:[%s57 + $0x8] sm:$0xf]
  %v1103 = vld [vmem:[%s57 + $0xc] sm:$0xf]
  %v1104 = vld [vmem:[%s59] sm:$0x1]
  %v1106 = vperm.slane %v1104, 0
  %v1112 = vunpack.c.l.b16 %v1100
  %v1113 = vunpack.c.l.b16 %v1101
  %v1114 = vunpack.c.l.b16 %v1102
  %v1115 = vunpack.c.l.b16 %v1103
  %v1116 = vpack.c.b16 %v1113, %v1112
  %v1117 = vpack.c.b16 %v1115, %v1114
  %v1121 = vsel %vm581, %v1098, 0
  %v1124 = vsel %vm581, %v1099, 0
  %1126 = vmatpush.bf16.msra.mxu0 0
  %1127 = vmatpush.bf16.msra.mxu0 0
  %1128 = vmatpush.bf16.msra.mxu0 0
  %1129 = vmatpush.bf16.msra.mxu0 0
  %1130 = vmatpush.bf16.msra.mxu0 0
  %1131 = vmatpush.bf16.msra.mxu0 0
  %1132 = vmatpush.bf16.msra.mxu0 %v1117
  %1133 = vmatpush.bf16.msra.mxu0 %v1116
  %1134 = vmatmul.bf16.gmra.mxu0 %v1121
  %v1135 = vpop.f32.mrf.mxu0
  %v1136 = vadd.f32 %v1106, %v1135
  %v1137 = vpop.f32.mrf.mxu0
  %v1138 = vadd.f32 %v1106, %v1137
  %1139 = vmatmul.bf16.gmra.mxu0 %v1124
  %v1140 = vpop.f32.mrf.mxu0
  %v1141 = vadd.f32 %v1106, %v1140
  %v1142 = vpop.f32.mrf.mxu0
  %v1143 = vadd.f32 %v1106, %v1142
  %1144 = vdwg.mxu0
  %v1145 = vmax.f32 %v1136, 0.0
  %v1146 = vmax.f32 %v1138, 0.0
  %v1147 = vmax.f32 %v1141, 0.0
  %v1148 = vmax.f32 %v1143, 0.0
  %v1149 = vpack.c.bf16 %v1146, %v1145
  %v1150 = vpack.c.bf16 %v1148, %v1147
  %v1151 = vld [vmem:[%s61] sm:$0xf]
  %v1152 = vld [vmem:[%s61 + $0x4] sm:$0xf]
  %v1153 = vld [vmem:[%s61 + $0x8] sm:$0xf]
  %v1154 = vld [vmem:[%s61 + $0xc] sm:$0xf]
  %v1155 = vld [vmem:[%s63] sm:$0x1]
  %v1157 = vperm.slane %v1155, 0
  %v1163 = vunpack.c.l.b16 %v1151
  %v1164 = vunpack.c.l.b16 %v1152
  %v1165 = vunpack.c.l.b16 %v1153
  %v1166 = vunpack.c.l.b16 %v1154
  %v1167 = vpack.c.b16 %v1164, %v1163
  %v1168 = vpack.c.b16 %v1166, %v1165
  %v1172 = vsel %vm581, %v1149, 0
  %v1175 = vsel %vm581, %v1150, 0
  %1177 = vmatpush.bf16.msra.mxu0 0
  %1178 = vmatpush.bf16.msra.mxu0 0
  %1179 = vmatpush.bf16.msra.mxu0 0
  %1180 = vmatpush.bf16.msra.mxu0 0
  %1181 = vmatpush.bf16.msra.mxu0 0
  %1182 = vmatpush.bf16.msra.mxu0 0
  %1183 = vmatpush.bf16.msra.mxu0 %v1168
  %1184 = vmatpush.bf16.msra.mxu0 %v1167
  %1185 = vmatmul.bf16.gmra.mxu0 %v1172
  %v1186 = vpop.f32.mrf.mxu0
  %v1187 = vadd.f32 %v1157, %v1186
  %v1188 = vpop.f32.mrf.mxu0
  %v1189 = vadd.f32 %v1157, %v1188
  %1190 = vmatmul.bf16.gmra.mxu0 %v1175
  %v1191 = vpop.f32.mrf.mxu0
  %v1192 = vadd.f32 %v1157, %v1191
  %v1193 = vpop.f32.mrf.mxu0
  %v1194 = vadd.f32 %v1157, %v1193
  %1195 = vdwg.mxu0
  %v1196 = vsub.f32 0.0, %v1187
  %v1197 = vsub.f32 0.0, %v1189
  %v1198 = vsub.f32 0.0, %v1192
  %v1199 = vsub.f32 0.0, %v1194
  %v1200 = vmul.f32 %v1196, 1.442695
  %v1201 = vpow.pop %v1200
  %v1202 = vmul.f32 %v1197, 1.442695
  %v1203 = vpow.pop %v1202
  %v1204 = vmul.f32 %v1198, 1.442695
  %v1205 = vpow.pop %v1204
  %v1206 = vmul.f32 %v1199, 1.442695
  %v1207 = vpow.pop %v1206
  %v1208 = vadd.f32 %v1201, 1.0
  %v1209 = vadd.f32 %v1203, 1.0
  %v1210 = vadd.f32 %v1205, 1.0
  %v1211 = vadd.f32 %v1207, 1.0
  %v1212 = vrcp.pop %v1208
  %v1213 = vmul.f32 %v1208, %v1212
  %v1214 = vsub.f32 1.0, %v1213
  %v1215 = vmul.f32 %v1212, %v1214
  %v1216 = vadd.f32 %v1212, %v1215
  %vm1217 = vweird.f32 %v1208
  %vm1218 = vweird.f32 %v1212
  %vm1219 = vmor %vm1217, %vm1218
  %v1220 = vsel %vm1219, %v1212, %v1216
  %v1221 = vand.u32 2147483647, %v1208
  %vm1222 = vcmp.eq.f32.partialorder %v1221, 8.507059e+37
  %v1223 = vand.u32 %v1208, 2147483648
  %v1224 = vor.u32 1.1754944e-38, %v1223
  %v1225 = vsel %vm1222, %v1224, %v1220
  %v1226 = vmul.f32 1.0, %v1225
  %v1227 = vrcp.pop %v1209
  %v1228 = vmul.f32 %v1209, %v1227
  %v1229 = vsub.f32 1.0, %v1228
  %v1230 = vmul.f32 %v1227, %v1229
  %v1231 = vadd.f32 %v1227, %v1230
  %vm1232 = vweird.f32 %v1209
  %vm1233 = vweird.f32 %v1227
  %vm1234 = vmor %vm1232, %vm1233
  %v1235 = vsel %vm1234, %v1227, %v1231
  %v1236 = vand.u32 2147483647, %v1209
  %vm1237 = vcmp.eq.f32.partialorder %v1236, 8.507059e+37
  %v1238 = vand.u32 %v1209, 2147483648
  %v1239 = vor.u32 1.1754944e-38, %v1238
  %v1240 = vsel %vm1237, %v1239, %v1235
  %v1241 = vmul.f32 1.0, %v1240
  %v1242 = vrcp.pop %v1210
  %v1243 = vmul.f32 %v1210, %v1242
  %v1244 = vsub.f32 1.0, %v1243
  %v1245 = vmul.f32 %v1242, %v1244
  %v1246 = vadd.f32 %v1242, %v1245
  %vm1247 = vweird.f32 %v1210
  %vm1248 = vweird.f32 %v1242
  %vm1249 = vmor %vm1247, %vm1248
  %v1250 = vsel %vm1249, %v1242, %v1246
  %v1251 = vand.u32 2147483647, %v1210
  %vm1252 = vcmp.eq.f32.partialorder %v1251, 8.507059e+37
  %v1253 = vand.u32 %v1210, 2147483648
  %v1254 = vor.u32 1.1754944e-38, %v1253
  %v1255 = vsel %vm1252, %v1254, %v1250
  %v1256 = vmul.f32 1.0, %v1255
  %v1257 = vrcp.pop %v1211
  %v1258 = vmul.f32 %v1211, %v1257
  %v1259 = vsub.f32 1.0, %v1258
  %v1260 = vmul.f32 %v1257, %v1259
  %v1261 = vadd.f32 %v1257, %v1260
  %vm1262 = vweird.f32 %v1211
  %vm1263 = vweird.f32 %v1257
  %vm1264 = vmor %vm1262, %vm1263
  %v1265 = vsel %vm1264, %v1257, %v1261
  %v1266 = vand.u32 2147483647, %v1211
  %vm1267 = vcmp.eq.f32.partialorder %v1266, 8.507059e+37
  %v1268 = vand.u32 %v1211, 2147483648
  %v1269 = vor.u32 1.1754944e-38, %v1268
  %v1270 = vsel %vm1267, %v1269, %v1265
  %v1271 = vmul.f32 1.0, %v1270
  %1276 = vrot.lane.b32.xlu0 %v1085, 96
  %v1277 = vpop.permute.xlu0 %1276
  %1278 = vrot.lane.b32.xlu0 %v1087, 96
  %v1279 = vpop.permute.xlu0 %1278
  %1280 = vrot.lane.b32.xlu0 %v1090, 96
  %v1281 = vpop.permute.xlu0 %1280
  %1282 = vrot.lane.b32.xlu0 %v1092, 96
  %v1283 = vpop.permute.xlu0 %1282
  %1292 = vrot.lane.b32.xlu0 %v1226, 2
  %v1293 = vpop.permute.xlu0 %1292
  %1294 = vrot.lane.b32.xlu0 %v1241, 2
  %v1295 = vpop.permute.xlu0 %1294
  %1296 = vrot.lane.b32.xlu0 %v1256, 2
  %v1297 = vpop.permute.xlu0 %1296
  %1298 = vrot.lane.b32.xlu0 %v1271, 2
  %v1299 = vpop.permute.xlu0 %1298
  %vm1304 = vcmask 15360
  %v1305 = vsel %vm1304, %v1277, %v1293
  %v1306 = vsel %vm1304, %v1279, %v1295
  %v1307 = vsel %vm1304, %v1281, %v1297
  %v1308 = vsel %vm1304, %v1283, %v1299
  %vm1309 = vcmask 48128
  %v1310 = vsel %vm1309, %v1305, 0.0
  %v1311 = vsel %vm1309, %v1306, 0.0
  %v1312 = vsel %vm1309, %v1307, 0.0
  %v1313 = vsel %vm1309, %v1308, 0.0
  %1314 = vst [vmem:[%s65] sm:$0xff] %v1310
  %1315 = vst [vmem:[%s65 + $0x8] sm:$0xff] %v1311
  %1316 = vst [vmem:[%s65 + $0x10] sm:$0xff] %v1312
  %1317 = vst [vmem:[%s65 + $0x18] sm:$0xff] %v1313
  // Predicated region
  $region130: #{forward.1} parent=0 // pred_check
    _
  $region131: #{forward.1} parent=0 // pred_check_branch
    %1319 = sbr.rel (0) target = $region133
  $region132: #{forward.1} parent=0 // pred_region
    _
  $region133: #{forward.1} parent=0 // pred_fallthru
    _
  // Predicated region
  $region134: #{forward.1} parent=0 // pred_check
    _
  $region135: #{forward.1} parent=0 // pred_check_branch
    %1321 = sbr.rel (0) target = $region137
  $region136: #{forward.1} parent=0 // pred_region
    _
  $region137: #{forward.1} parent=0 // pred_fallthru
    _

</llo_original>
